<compile_context>
chip_gen: v6e
topology: v6e:2x2x1
jax: 0.10.0
libtpu: 0.0.40
codegen_flags: <defaults>
</compile_context>

<pallas_src>
import functools

import jax
import jax.numpy as jnp
from jax.experimental import pallas as pl
from jax.experimental.pallas import tpu as pltpu


def _round_up(x, m):
    return ((x + m - 1) // m) * m


def _compare_kernel(f1_ref, f2_ref, wa_ref, wb_ref, b_ref, out_ref):
    # out = ReLU(feat1 @ Wa + feat2 @ Wb + b)   (== Linear(cat([f1, f2])) + ReLU)
    acc = jnp.dot(f1_ref[...], wa_ref[...], preferred_element_type=jnp.float32)
    acc = acc + jnp.dot(f2_ref[...], wb_ref[...],
                        preferred_element_type=jnp.float32)
    acc = acc + b_ref[...].astype(jnp.float32)
    out_ref[...] = jnp.maximum(acc, 0.0).astype(out_ref.dtype)


@functools.partial(jax.jit, static_argnames=("block_rows",))
def _compare_pallas(feat1, feat2, wa, wb, b, *, block_rows=2048):
    """Large-batch path: one pallas_call over the whole batch."""
    B, H = feat1.shape

    # Pack `pack` logical rows per 128-lane row when H divides 128 so all
    # loads/stores are lane-dense.  The reshape is a free contiguous view
    # under jit; the weights become block-diagonal kron(I_pack, W).
    pack = 128 // H if (H < 128 and 128 % H == 0 and B % (128 // H) == 0) else 1
    if pack > 1:
        f1 = feat1.reshape(B // pack, H * pack)
        f2 = feat2.reshape(B // pack, H * pack)
        eye = jnp.eye(pack, dtype=wa.dtype)
        wa_p = jnp.kron(eye, wa)            # [H*pack, H*pack] block-diagonal
        wb_p = jnp.kron(eye, wb)
        b_p = jnp.tile(b, (1, pack))        # [1, H*pack]
    else:
        f1, f2, wa_p, wb_p, b_p = feat1, feat2, wa, wb, b

    n_rows, width = f1.shape
    # Big tiles (step overhead amortized) but at least 2 grid steps so both
    # v7x TensorCores get work; rows padded only inside the last tile.
    blk = max(8, min(block_rows, _round_up(pl.cdiv(n_rows, 2), 8)))
    grid = (pl.cdiv(n_rows, blk),)

    out = pl.pallas_call(
        _compare_kernel,
        out_shape=jax.ShapeDtypeStruct((n_rows, width), feat1.dtype),
        grid_spec=pltpu.PrefetchScalarGridSpec(
            num_scalar_prefetch=0,
            grid=grid,
            in_specs=[
                pl.BlockSpec((blk, width), lambda i: (i, 0)),   # feat1 tile
                pl.BlockSpec((blk, width), lambda i: (i, 0)),   # feat2 tile
                pl.BlockSpec(wa_p.shape, lambda i: (0, 0)),     # Wa (resident)
                pl.BlockSpec(wb_p.shape, lambda i: (0, 0)),     # Wb (resident)
                pl.BlockSpec(b_p.shape, lambda i: (0, 0)),      # bias (resident)
            ],
            out_specs=pl.BlockSpec((blk, width), lambda i: (i, 0)),
        ),
        compiler_params=pltpu.CompilerParams(
            dimension_semantics=("parallel",)),
    )(f1, f2, wa_p, wb_p, b_p)

    return out.reshape(B, H)


@jax.jit
def _compare_xla(feat1, feat2, wa, wb, b):
    """Tiny-batch fast path: plain XLA (kernel launch would dominate)."""
    acc = (jnp.dot(feat1, wa, preferred_element_type=jnp.float32)
           + jnp.dot(feat2, wb, preferred_element_type=jnp.float32)
           + b.astype(jnp.float32))
    return jnp.maximum(acc, 0.0).astype(feat1.dtype)


def compare_forward(feat1, feat2, params, *, block_rows=2048,
                    min_pallas_batch=4096):
    """CompareModule forward.

    feat1/feat2: [H] (exact PyTorch module signature) or [B, H] (batched).
    params: dict with 'wa' [H,H], 'wb' [H,H] ([in, out] halves of the torch
    Linear weight) and 'b' [1,H].  Returns [H] or [B, H].
    """
    wa, wb, b = params["wa"], params["wb"], params["b"]
    squeeze = feat1.ndim == 1
    if squeeze:
        feat1, feat2 = feat1[None, :], feat2[None, :]
    B = feat1.shape[0]
    if B >= min_pallas_batch:
        out = _compare_pallas(feat1, feat2, wa, wb, b, block_rows=block_rows)
    else:
        out = _compare_xla(feat1, feat2, wa, wb, b)
    return out[0] if squeeze else out


def _reference_forward(feat1, feat2, params):
    """Pure-JAX mirror of the PyTorch CompareModule (works for [H] or [B,H])."""
    w = jnp.concatenate([params["wa"], params["wb"]], axis=0)   # [2H, H]
    x = jnp.concatenate([feat1, feat2], axis=-1)                # torch.cat
    return jnp.maximum(x @ w + params["b"][0], 0.0)


def _init_params(key, hidden):
    k1, k2, k3 = jax.random.split(key, 3)
    scale = 1.0 / jnp.sqrt(2.0 * hidden)   # torch Linear init bound 1/sqrt(fan_in)
    wa = jax.random.uniform(k1, (hidden, hidden), jnp.float32, -scale, scale)
    wb = jax.random.uniform(k2, (hidden, hidden), jnp.float32, -scale, scale)
    b = jax.random.uniform(k3, (1, hidden), jnp.float32, -scale, scale)
    return dict(wa=wa, wb=wb, b=b)


if __name__ == "__main__":
    hidden = 32
    key = jax.random.PRNGKey(0)
    k1, k2, kp = jax.random.split(key, 3)
    params = _init_params(kp, hidden)

    # Batched path through the Pallas kernel.  9000 rows: lane-packed to
    # (2250, 128), 2 grid steps, ragged last tile (no wrapper padding).
    batch = 9000
    f1_b = jax.random.normal(k1, (batch, hidden), jnp.float32)
    f2_b = jax.random.normal(k2, (batch, hidden), jnp.float32)
    out_b = jax.block_until_ready(compare_forward(f1_b, f2_b, params))
    ref_b = _reference_forward(f1_b, f2_b, params)
    assert out_b.shape == (batch, hidden)
    assert jnp.allclose(out_b, ref_b, atol=1e-4, rtol=1e-4), \
        float(jnp.max(jnp.abs(out_b - ref_b)))

    # Exact PyTorch module signature: single [H] vectors (XLA fast path).
    out_1 = jax.block_until_ready(compare_forward(f1_b[0], f2_b[0], params))
    ref_1 = _reference_forward(f1_b[0], f2_b[0], params)
    assert out_1.shape == (hidden,)
    assert jnp.allclose(out_1, ref_1, atol=1e-4, rtol=1e-4)

    print("KERNEL_OK")
</pallas_src>

<mosaic_0001>
module attributes {stable_mosaic.version = 11 : i64} {
  func.func @_compare_kernel(%arg0: i32, %arg1: memref<1128x128xf32, #tpu.memory_space<vmem>>, %arg2: memref<1128x128xf32, #tpu.memory_space<vmem>>, %arg3: memref<128x128xf32, #tpu.memory_space<vmem>>, %arg4: memref<128x128xf32, #tpu.memory_space<vmem>>, %arg5: memref<1x128xf32, #tpu.memory_space<vmem>>, %arg6: memref<1128x128xf32, #tpu.memory_space<vmem>>) attributes {dimension_semantics = [#tpu.dimension_semantics<parallel>], iteration_bounds = array<i64: 2>, scalar_prefetch = 0 : i64, scratch_operands = 0 : i64, tpu.core_type = #tpu.core_type<tc>, window_params = [{transform_indices = @transform_0, window_bounds = array<i64: 1128, 128>}, {transform_indices = @transform_1, window_bounds = array<i64: 1128, 128>}, {pipeline_mode = #tpu.pipeline_mode<synchronous>, transform_indices = @transform_2, window_bounds = array<i64: 128, 128>}, {pipeline_mode = #tpu.pipeline_mode<synchronous>, transform_indices = @transform_3, window_bounds = array<i64: 128, 128>}, {pipeline_mode = #tpu.pipeline_mode<synchronous>, transform_indices = @transform_4, window_bounds = array<i64: 1, 128>}, {transform_indices = @transform_5, window_bounds = array<i64: 1128, 128>}]} {
    %c0 = arith.constant 0 : index
    %c0_0 = arith.constant 0 : index
    %0 = vector.load %arg1[%c0, %c0_0] : memref<1128x128xf32, #tpu.memory_space<vmem>>, vector<1128x128xf32>
    %c0_1 = arith.constant 0 : index
    %c0_2 = arith.constant 0 : index
    %1 = vector.load %arg3[%c0_1, %c0_2] : memref<128x128xf32, #tpu.memory_space<vmem>>, vector<128x128xf32>
    %cst = arith.constant dense<0.000000e+00> : vector<1128x128xf32>
    %2 = tpu.matmul %0, %1, %cst {dimension_numbers = #tpu.dot_dimension_numbers<[1], [0], [0], [1], [0, 0, 1, 1], [], []>} : vector<1128x128xf32>, vector<128x128xf32>, vector<1128x128xf32> -> vector<1128x128xf32>
    %c0_3 = arith.constant 0 : index
    %c0_4 = arith.constant 0 : index
    %3 = vector.load %arg2[%c0_3, %c0_4] : memref<1128x128xf32, #tpu.memory_space<vmem>>, vector<1128x128xf32>
    %c0_5 = arith.constant 0 : index
    %c0_6 = arith.constant 0 : index
    %4 = vector.load %arg4[%c0_5, %c0_6] : memref<128x128xf32, #tpu.memory_space<vmem>>, vector<128x128xf32>
    %cst_7 = arith.constant dense<0.000000e+00> : vector<1128x128xf32>
    %5 = tpu.matmul %3, %4, %cst_7 {dimension_numbers = #tpu.dot_dimension_numbers<[1], [0], [0], [1], [0, 0, 1, 1], [], []>} : vector<1128x128xf32>, vector<128x128xf32>, vector<1128x128xf32> -> vector<1128x128xf32>
    %6 = arith.addf %2, %5 : vector<1128x128xf32>
    %c0_8 = arith.constant 0 : index
    %c0_9 = arith.constant 0 : index
    %7 = vector.load %arg5[%c0_8, %c0_9] : memref<1x128xf32, #tpu.memory_space<vmem>>, vector<1x128xf32>
    %8 = vector.broadcast %7 : vector<1x128xf32> to vector<1128x128xf32>
    %9 = arith.addf %6, %8 : vector<1128x128xf32>
    %cst_10 = arith.constant 0.000000e+00 : f32
    %10 = vector.broadcast %cst_10 : f32 to vector<1128x128xf32>
    %11 = arith.maximumf %9, %10 : vector<1128x128xf32>
    %c0_11 = arith.constant 0 : index
    %c0_12 = arith.constant 0 : index
    %12 = vector.load %arg6[%c0_11, %c0_12] : memref<1128x128xf32, #tpu.memory_space<vmem>>, vector<1128x128xf32>
    tpu.vector_store %arg6[%c0_11, %c0_12], %11 {strides = array<i32>} : memref<1128x128xf32, #tpu.memory_space<vmem>>, vector<1128x128xf32>,
    return
  }
  func.func @transform_0(%arg0: i32) -> (i32, i32) {
    %c0_i32 = arith.constant 0 : i32
    %c0_i32_0 = arith.constant 0 : i32
    return %arg0, %c0_i32 : i32, i32
  }
  func.func @transform_1(%arg0: i32) -> (i32, i32) {
    %c0_i32 = arith.constant 0 : i32
    %c0_i32_0 = arith.constant 0 : i32
    return %arg0, %c0_i32 : i32, i32
  }
  func.func @transform_2(%arg0: i32) -> (i32, i32) {
    %c0_i32 = arith.constant 0 : i32
    %c0_i32_0 = arith.constant 0 : i32
    %c0_i32_1 = arith.constant 0 : i32
    return %c0_i32, %c0_i32_0 : i32, i32
  }
  func.func @transform_3(%arg0: i32) -> (i32, i32) {
    %c0_i32 = arith.constant 0 : i32
    %c0_i32_0 = arith.constant 0 : i32
    %c0_i32_1 = arith.constant 0 : i32
    return %c0_i32, %c0_i32_0 : i32, i32
  }
  func.func @transform_4(%arg0: i32) -> (i32, i32) {
    %c0_i32 = arith.constant 0 : i32
    %c0_i32_0 = arith.constant 0 : i32
    %c0_i32_1 = arith.constant 0 : i32
    return %c0_i32, %c0_i32_0 : i32, i32
  }
  func.func @transform_5(%arg0: i32) -> (i32, i32) {
    %c0_i32 = arith.constant 0 : i32
    %c0_i32_0 = arith.constant 0 : i32
    return %arg0, %c0_i32 : i32, i32
  }
}

</mosaic_0001>

<llo_original>
// kernel: _compare_pallas.1
$region0: #{_compare_pallas.1}
  #allocation0 [shape = 'u32[]', space=smem, size = 0x4, offset = 0x4, fixed_abs, tag = 'smem constant byte address 0x4 - core index']
  #allocation1 [shape = 'u32[144,128]{1,0:T(1,128)}', space=vmem, size = 0x12000, scoped, tag = 'internal scratch']
  %s0 = inlined_call_operand.vmem [shape: f32[2250,128], index: 0, kind: input, shape index: {}]
  %s1 = inlined_call_operand.vmem [shape: f32[2250,128], index: 1, kind: input, shape index: {}]
  %s2 = inlined_call_operand.vmem [shape: f32[128,128], index: 2, kind: input, shape index: {}]
  %s3 = inlined_call_operand.vmem [shape: f32[128,128], index: 3, kind: input, shape index: {}]
  %s4 = inlined_call_operand.vmem [shape: f32[1,128], index: 4, kind: input, shape index: {}]
  %s5 = inlined_call_operand.vmem [shape: f32[2250,128], index: 5, kind: output, shape index: {}]
  %s6 = sld [smem:[#allocation0]]
  $region53: #{_compare_pallas.1} parent=0
    _
  %s8 = ssub.s32 1, %s6
  %s9 = scalar_select 0, %s8, %s6
  loop: start=0, step=1, limit=4
  $region2: #{_compare_pallas.1} parent=0 // loop_pre_header
    _
  $region3: #{_compare_pallas.1} parent=0 // loop_header
    %s11 = sphi 0, %s15
    %p12 = scmp.ge.s32.totalorder %s11, 4
    %s21 = sphi 0, %s23
    %s24 = sphi 0, %s21
    %s25 = sphi 0, %s24
    %s41 = sphi 0, %s25
    %s47 = sphi 0, %s49
    %s50 = sphi 0, %s47
    %s51 = sphi 0, %s50
    %s67 = sphi 0, %s51
    %s71 = sphi 0, %s71
    %s73 = sphi 0, %s71
    %s74 = sphi 0, %s73
    %s88 = sphi 0, %s74
    %s92 = sphi 0, %s92
    %s94 = sphi 0, %s92
    %s95 = sphi 0, %s94
    %s109 = sphi 0, %s95
    %s113 = sphi 0, %s113
    %s115 = sphi 0, %s113
    %s116 = sphi 0, %s115
    %s130 = sphi 0, %s116
    %s136 = sphi 0, %s138
    %s139 = sphi 0, %s136
    %s140 = sphi 0, %s139
    %s156 = sphi 0, %s140
  $region4: #{_compare_pallas.1} parent=0 // loop_header_branch
    %14 = sbr.rel (%p12) target = $region8
  $region5: #{_compare_pallas.1} parent=0 // loop_body
    %s16 = ssub.s32 %s11, 1
    %s17 = ssub.s32 %s11, 2
    %s18 = sadd.s32 %s11, 1
    %s19 = ssub.s32 %s11, %s18
    %p20 = scmp.eq.s32.totalorder %s19, 0
    %s22 = sadd.s32 %s21, 1
    %s23 = scalar_select %p20, %s21, %s22
    %p26 = pneg %p20
    %p27 = scmp.eq.s32.totalorder %s11, 1
    %p28 = por %p26, %p27
    %p29 = scmp.ne.s32.totalorder %s21, %s24
    %p30 = scmp.eq.s32.totalorder %s11, 0
    %p31 = por %p29, %p30
    %p32 = scmp.ne.s32.totalorder %s21, %s24
    %p33 = scmp.eq.s32.totalorder %s16, 1
    %p34 = por %p32, %p33
    %p35 = scmp.ne.s32.totalorder %s24, %s25
    %p36 = scmp.eq.s32.totalorder %s16, 0
    %p37 = por %p35, %p36
    %p38 = scmp.ne.s32.totalorder %s24, %s25
    %p39 = scmp.eq.s32.totalorder %s17, 1
    %p40 = por %p38, %p39
    %p42 = scmp.ne.s32.totalorder %s25, %s41
    %p43 = scmp.eq.s32.totalorder %s17, 0
    %p44 = por %p42, %p43
    %s45 = ssub.s32 %s11, %s18
    %p46 = scmp.eq.s32.totalorder %s45, 0
    %s48 = sadd.s32 %s47, 1
    %s49 = scalar_select %p46, %s47, %s48
    %p52 = pneg %p46
    %p53 = scmp.eq.s32.totalorder %s11, 1
    %p54 = por %p52, %p53
    %p55 = scmp.ne.s32.totalorder %s47, %s50
    %p56 = scmp.eq.s32.totalorder %s11, 0
    %p57 = por %p55, %p56
    %p58 = scmp.ne.s32.totalorder %s47, %s50
    %p59 = scmp.eq.s32.totalorder %s16, 1
    %p60 = por %p58, %p59
    %p61 = scmp.ne.s32.totalorder %s50, %s51
    %p62 = scmp.eq.s32.totalorder %s16, 0
    %p63 = por %p61, %p62
    %p64 = scmp.ne.s32.totalorder %s50, %s51
    %p65 = scmp.eq.s32.totalorder %s17, 1
    %p66 = por %p64, %p65
    %p68 = scmp.ne.s32.totalorder %s51, %s67
    %p69 = scmp.eq.s32.totalorder %s17, 0
    %p70 = por %p68, %p69
    %s72 = sadd.s32 %s71, 1
    %p75 = scmp.eq.s32.totalorder %s11, 1
    %p76 = scmp.ne.s32.totalorder %s71, %s73
    %p77 = scmp.eq.s32.totalorder %s11, 0
    %p78 = por %p76, %p77
    %p79 = scmp.ne.s32.totalorder %s71, %s73
    %p80 = scmp.eq.s32.totalorder %s16, 1
    %p81 = por %p79, %p80
    %p82 = scmp.ne.s32.totalorder %s73, %s74
    %p83 = scmp.eq.s32.totalorder %s16, 0
    %p84 = por %p82, %p83
    %p85 = scmp.ne.s32.totalorder %s73, %s74
    %p86 = scmp.eq.s32.totalorder %s17, 1
    %p87 = por %p85, %p86
    %p89 = scmp.ne.s32.totalorder %s74, %s88
    %p90 = scmp.eq.s32.totalorder %s17, 0
    %p91 = por %p89, %p90
    %s93 = sadd.s32 %s92, 1
    %p96 = scmp.eq.s32.totalorder %s11, 1
    %p97 = scmp.ne.s32.totalorder %s92, %s94
    %p98 = scmp.eq.s32.totalorder %s11, 0
    %p99 = por %p97, %p98
    %p100 = scmp.ne.s32.totalorder %s92, %s94
    %p101 = scmp.eq.s32.totalorder %s16, 1
    %p102 = por %p100, %p101
    %p103 = scmp.ne.s32.totalorder %s94, %s95
    %p104 = scmp.eq.s32.totalorder %s16, 0
    %p105 = por %p103, %p104
    %p106 = scmp.ne.s32.totalorder %s94, %s95
    %p107 = scmp.eq.s32.totalorder %s17, 1
    %p108 = por %p106, %p107
    %p110 = scmp.ne.s32.totalorder %s95, %s109
    %p111 = scmp.eq.s32.totalorder %s17, 0
    %p112 = por %p110, %p111
    %s114 = sadd.s32 %s113, 1
    %p117 = scmp.eq.s32.totalorder %s11, 1
    %p118 = scmp.ne.s32.totalorder %s113, %s115
    %p119 = scmp.eq.s32.totalorder %s11, 0
    %p120 = por %p118, %p119
    %p121 = scmp.ne.s32.totalorder %s113, %s115
    %p122 = scmp.eq.s32.totalorder %s16, 1
    %p123 = por %p121, %p122
    %p124 = scmp.ne.s32.totalorder %s115, %s116
    %p125 = scmp.eq.s32.totalorder %s16, 0
    %p126 = por %p124, %p125
    %p127 = scmp.ne.s32.totalorder %s115, %s116
    %p128 = scmp.eq.s32.totalorder %s17, 1
    %p129 = por %p127, %p128
    %p131 = scmp.ne.s32.totalorder %s116, %s130
    %p132 = scmp.eq.s32.totalorder %s17, 0
    %p133 = por %p131, %p132
    %s134 = ssub.s32 %s11, %s18
    %p135 = scmp.eq.s32.totalorder %s134, 0
    %s137 = sadd.s32 %s136, 1
    %s138 = scalar_select %p135, %s136, %s137
    %p141 = pneg %p135
    %p142 = scmp.eq.s32.totalorder %s11, 1
    %p143 = por %p141, %p142
    %p144 = scmp.ne.s32.totalorder %s136, %s139
    %p145 = scmp.eq.s32.totalorder %s11, 0
    %p146 = por %p144, %p145
    %p147 = scmp.ne.s32.totalorder %s136, %s139
    %p148 = scmp.eq.s32.totalorder %s16, 1
    %p149 = por %p147, %p148
    %p150 = scmp.ne.s32.totalorder %s139, %s140
    %p151 = scmp.eq.s32.totalorder %s16, 0
    %p152 = por %p150, %p151
    %p153 = scmp.ne.s32.totalorder %s139, %s140
    %p154 = scmp.eq.s32.totalorder %s17, 1
    %p155 = por %p153, %p154
    %p157 = scmp.ne.s32.totalorder %s140, %s156
    %p158 = scmp.eq.s32.totalorder %s17, 0
    %p159 = por %p157, %p158
    %p160 = scmp.le.s32.totalorder 1, %s11
    %p161 = scmp.lt.s32.totalorder %s11, 3
    %p162 = pnand %p160, %p161
    %p163 = pneg %p162
    // Predicated region
    $region9: #{_compare_pallas.1} parent=5 // pred_check
      _
    $region10: #{_compare_pallas.1} parent=5 // pred_check_branch
      %165 = sbr.rel (%p162) target = $region12
    $region11: #{_compare_pallas.1} parent=5 // pred_region
      %s166 = ssub.s32 %s11, 1
      // Predicated region
      $region13: #{_compare_pallas.1} parent=11 // pred_check
        %p167 = pneg %p84
      $region14: #{_compare_pallas.1} parent=11 // pred_check_branch
        %169 = sbr.rel (%p167) target = $region16
      $region15: #{_compare_pallas.1} parent=11 // pred_region
        _
      $region16: #{_compare_pallas.1} parent=11 // pred_fallthru
        _
      // Predicated region
      $region17: #{_compare_pallas.1} parent=11 // pred_check
        %p170 = pneg %p105
      $region18: #{_compare_pallas.1} parent=11 // pred_check_branch
        %172 = sbr.rel (%p170) target = $region20
      $region19: #{_compare_pallas.1} parent=11 // pred_region
        _
      $region20: #{_compare_pallas.1} parent=11 // pred_fallthru
        _
      // Predicated region
      $region21: #{_compare_pallas.1} parent=11 // pred_check
        %p173 = pneg %p126
      $region22: #{_compare_pallas.1} parent=11 // pred_check_branch
        %175 = sbr.rel (%p173) target = $region24
      $region23: #{_compare_pallas.1} parent=11 // pred_region
        _
      $region24: #{_compare_pallas.1} parent=11 // pred_fallthru
        _
    $region12: #{_compare_pallas.1} parent=5 // pred_fallthru
      _
    %p176 = scmp.lt.s32.totalorder %s11, 2
    // Predicated region
    $region25: #{_compare_pallas.1} parent=5 // pred_check
      %p177 = pneg %p176
    $region26: #{_compare_pallas.1} parent=5 // pred_check_branch
      %179 = sbr.rel (%p177) target = $region28
    $region27: #{_compare_pallas.1} parent=5 // pred_region
      // Predicated region
      $region29: #{_compare_pallas.1} parent=27 // pred_check
        %p180 = pneg %p31
      $region30: #{_compare_pallas.1} parent=27 // pred_check_branch
        %182 = sbr.rel (%p180) target = $region32
      $region31: #{_compare_pallas.1} parent=27 // pred_region
        %s183 = smul.u32 141, %s11
        %p184 = scmp.lt.s32.totalorder %s183, 281
        %s185 = scalar_select %p184, %s183, 281
        %s186 = smul.addr %s185, 8
        %s187 = scalar_lea.vmem %s0, %s186
        %s188 = smul.u32 141, %s11
      $region32: #{_compare_pallas.1} parent=27 // pred_fallthru
        _
      // Predicated region
      $region33: #{_compare_pallas.1} parent=27 // pred_check
        %p189 = pneg %p57
      $region34: #{_compare_pallas.1} parent=27 // pred_check_branch
        %191 = sbr.rel (%p189) target = $region36
      $region35: #{_compare_pallas.1} parent=27 // pred_region
        %s192 = smul.u32 141, %s11
        %p193 = scmp.lt.s32.totalorder %s192, 281
        %s194 = scalar_select %p193, %s192, 281
        %s195 = smul.addr %s194, 8
        %s196 = scalar_lea.vmem %s1, %s195
        %s197 = smul.u32 141, %s11
      $region36: #{_compare_pallas.1} parent=27 // pred_fallthru
        _
    $region28: #{_compare_pallas.1} parent=5 // pred_fallthru
      _
    %p198 = scmp.le.s32.totalorder 1, %s11
    %p199 = scmp.lt.s32.totalorder %s11, 3
    %p200 = pnand %p198, %p199
    %p201 = pneg %p200
    // Predicated region
    $region37: #{_compare_pallas.1} parent=5 // pred_check
      _
    $region38: #{_compare_pallas.1} parent=5 // pred_check_branch
      %203 = sbr.rel (%p200) target = $region40
    $region39: #{_compare_pallas.1} parent=5 // pred_region
      %s204 = ssub.s32 %s11, 1
      %s205 = smul.u32 141, %s16
      %p206 = scmp.lt.s32.totalorder %s205, 281
      %s207 = scalar_select %p206, %s205, 281
      %s208 = smul.addr %s207, 8
      %s209 = scalar_lea.vmem %s0, %s208
      %p210 = pneg %p37
      %p211 = pneg %p34
      %s212 = smul.u32 141, %s16
      %p213 = scmp.lt.s32.totalorder %s212, 281
      %s214 = scalar_select %p213, %s212, 281
      %s215 = smul.addr %s214, 8
      %s216 = scalar_lea.vmem %s1, %s215
      %p217 = pneg %p63
      %p218 = pneg %p60
      %p219 = pneg %p84
      %p220 = pneg %p81
      %p221 = pneg %p105
      %p222 = pneg %p102
      %p223 = pneg %p126
      %p224 = pneg %p123
      %p225 = pneg %p152
      %p226 = pneg %p149
      %s227 = smul.u32 141, %s16
      %p228 = scmp.lt.s32.totalorder %s227, 281
      %s229 = scalar_select %p228, %s227, 281
      %s230 = smul.addr %s229, 8
      %s231 = scalar_lea.vmem %s5, %s230
      %s232 = smul.u32 141, %s16
      %p233 = scmp.lt.s32.totalorder %s232, 281
      %s234 = scalar_select %p233, %s232, 281
      %s235 = smul.addr %s234, 8
      %s236 = scalar_lea.vmem %s0, %s235
      %s237 = smul.u32 141, %s16
      %s238 = smul.u32 141, %s16
      %p239 = scmp.lt.s32.totalorder %s238, 281
      %s240 = scalar_select %p239, %s238, 281
      %s241 = smul.addr %s240, 8
      %s242 = scalar_lea.vmem %s1, %s241
      %s243 = smul.u32 141, %s16
      %s244 = smul.u32 141, %s16
      %p245 = scmp.lt.s32.totalorder %s244, 281
      %s246 = scalar_select %p245, %s244, 281
      %s247 = smul.addr %s246, 8
      %s248 = scalar_lea.vmem %s5, %s247
      %s249 = smul.u32 141, %s16
      %v250 = vld [vmem:[%s236] sm:$0xff]
      %v251 = vld [vmem:[%s236 + $0x8] sm:$0xff]
      %v252 = vld [vmem:[%s236 + $0x10] sm:$0xff]
      %v253 = vld [vmem:[%s236 + $0x18] sm:$0xff]
      %v254 = vld [vmem:[%s236 + $0x20] sm:$0xff]
      %v255 = vld [vmem:[%s236 + $0x28] sm:$0xff]
      %v256 = vld [vmem:[%s236 + $0x30] sm:$0xff]
      %v257 = vld [vmem:[%s236 + $0x38] sm:$0xff]
      %v258 = vld [vmem:[%s236 + $0x40] sm:$0xff]
      %v259 = vld [vmem:[%s236 + $0x48] sm:$0xff]
      %v260 = vld [vmem:[%s236 + $0x50] sm:$0xff]
      %v261 = vld [vmem:[%s236 + $0x58] sm:$0xff]
      %v262 = vld [vmem:[%s236 + $0x60] sm:$0xff]
      %v263 = vld [vmem:[%s236 + $0x68] sm:$0xff]
      %v264 = vld [vmem:[%s236 + $0x70] sm:$0xff]
      %v265 = vld [vmem:[%s236 + $0x78] sm:$0xff]
      %v266 = vld [vmem:[%s236 + $0x80] sm:$0xff]
      %v267 = vld [vmem:[%s236 + $0x88] sm:$0xff]
      %v268 = vld [vmem:[%s236 + $0x90] sm:$0xff]
      %v269 = vld [vmem:[%s236 + $0x98] sm:$0xff]
      %v270 = vld [vmem:[%s236 + $0xa0] sm:$0xff]
      %v271 = vld [vmem:[%s236 + $0xa8] sm:$0xff]
      %v272 = vld [vmem:[%s236 + $0xb0] sm:$0xff]
      %v273 = vld [vmem:[%s236 + $0xb8] sm:$0xff]
      %v274 = vld [vmem:[%s236 + $0xc0] sm:$0xff]
      %v275 = vld [vmem:[%s236 + $0xc8] sm:$0xff]
      %v276 = vld [vmem:[%s236 + $0xd0] sm:$0xff]
      %v277 = vld [vmem:[%s236 + $0xd8] sm:$0xff]
      %v278 = vld [vmem:[%s236 + $0xe0] sm:$0xff]
      %v279 = vld [vmem:[%s236 + $0xe8] sm:$0xff]
      %v280 = vld [vmem:[%s236 + $0xf0] sm:$0xff]
      %v281 = vld [vmem:[%s236 + $0xf8] sm:$0xff]
      %v282 = vld [vmem:[%s236 + $0x100] sm:$0xff]
      %v283 = vld [vmem:[%s236 + $0x108] sm:$0xff]
      %v284 = vld [vmem:[%s236 + $0x110] sm:$0xff]
      %v285 = vld [vmem:[%s236 + $0x118] sm:$0xff]
      %v286 = vld [vmem:[%s236 + $0x120] sm:$0xff]
      %v287 = vld [vmem:[%s236 + $0x128] sm:$0xff]
      %v288 = vld [vmem:[%s236 + $0x130] sm:$0xff]
      %v289 = vld [vmem:[%s236 + $0x138] sm:$0xff]
      %v290 = vld [vmem:[%s236 + $0x140] sm:$0xff]
      %v291 = vld [vmem:[%s236 + $0x148] sm:$0xff]
      %v292 = vld [vmem:[%s236 + $0x150] sm:$0xff]
      %v293 = vld [vmem:[%s236 + $0x158] sm:$0xff]
      %v294 = vld [vmem:[%s236 + $0x160] sm:$0xff]
      %v295 = vld [vmem:[%s236 + $0x168] sm:$0xff]
      %v296 = vld [vmem:[%s236 + $0x170] sm:$0xff]
      %v297 = vld [vmem:[%s236 + $0x178] sm:$0xff]
      %v298 = vld [vmem:[%s236 + $0x180] sm:$0xff]
      %v299 = vld [vmem:[%s236 + $0x188] sm:$0xff]
      %v300 = vld [vmem:[%s236 + $0x190] sm:$0xff]
      %v301 = vld [vmem:[%s236 + $0x198] sm:$0xff]
      %v302 = vld [vmem:[%s236 + $0x1a0] sm:$0xff]
      %v303 = vld [vmem:[%s236 + $0x1a8] sm:$0xff]
      %v304 = vld [vmem:[%s236 + $0x1b0] sm:$0xff]
      %v305 = vld [vmem:[%s236 + $0x1b8] sm:$0xff]
      %v306 = vld [vmem:[%s236 + $0x1c0] sm:$0xff]
      %v307 = vld [vmem:[%s236 + $0x1c8] sm:$0xff]
      %v308 = vld [vmem:[%s236 + $0x1d0] sm:$0xff]
      %v309 = vld [vmem:[%s236 + $0x1d8] sm:$0xff]
      %v310 = vld [vmem:[%s236 + $0x1e0] sm:$0xff]
      %v311 = vld [vmem:[%s236 + $0x1e8] sm:$0xff]
      %v312 = vld [vmem:[%s236 + $0x1f0] sm:$0xff]
      %v313 = vld [vmem:[%s236 + $0x1f8] sm:$0xff]
      %v314 = vld [vmem:[%s236 + $0x200] sm:$0xff]
      %v315 = vld [vmem:[%s236 + $0x208] sm:$0xff]
      %v316 = vld [vmem:[%s236 + $0x210] sm:$0xff]
      %v317 = vld [vmem:[%s236 + $0x218] sm:$0xff]
      %v318 = vld [vmem:[%s236 + $0x220] sm:$0xff]
      %v319 = vld [vmem:[%s236 + $0x228] sm:$0xff]
      %v320 = vld [vmem:[%s236 + $0x230] sm:$0xff]
      %v321 = vld [vmem:[%s236 + $0x238] sm:$0xff]
      %v322 = vld [vmem:[%s236 + $0x240] sm:$0xff]
      %v323 = vld [vmem:[%s236 + $0x248] sm:$0xff]
      %v324 = vld [vmem:[%s236 + $0x250] sm:$0xff]
      %v325 = vld [vmem:[%s236 + $0x258] sm:$0xff]
      %v326 = vld [vmem:[%s236 + $0x260] sm:$0xff]
      %v327 = vld [vmem:[%s236 + $0x268] sm:$0xff]
      %v328 = vld [vmem:[%s236 + $0x270] sm:$0xff]
      %v329 = vld [vmem:[%s236 + $0x278] sm:$0xff]
      %v330 = vld [vmem:[%s236 + $0x280] sm:$0xff]
      %v331 = vld [vmem:[%s236 + $0x288] sm:$0xff]
      %v332 = vld [vmem:[%s236 + $0x290] sm:$0xff]
      %v333 = vld [vmem:[%s236 + $0x298] sm:$0xff]
      %v334 = vld [vmem:[%s236 + $0x2a0] sm:$0xff]
      %v335 = vld [vmem:[%s236 + $0x2a8] sm:$0xff]
      %v336 = vld [vmem:[%s236 + $0x2b0] sm:$0xff]
      %v337 = vld [vmem:[%s236 + $0x2b8] sm:$0xff]
      %v338 = vld [vmem:[%s236 + $0x2c0] sm:$0xff]
      %v339 = vld [vmem:[%s236 + $0x2c8] sm:$0xff]
      %v340 = vld [vmem:[%s236 + $0x2d0] sm:$0xff]
      %v341 = vld [vmem:[%s236 + $0x2d8] sm:$0xff]
      %v342 = vld [vmem:[%s236 + $0x2e0] sm:$0xff]
      %v343 = vld [vmem:[%s236 + $0x2e8] sm:$0xff]
      %v344 = vld [vmem:[%s236 + $0x2f0] sm:$0xff]
      %v345 = vld [vmem:[%s236 + $0x2f8] sm:$0xff]
      %v346 = vld [vmem:[%s236 + $0x300] sm:$0xff]
      %v347 = vld [vmem:[%s236 + $0x308] sm:$0xff]
      %v348 = vld [vmem:[%s236 + $0x310] sm:$0xff]
      %v349 = vld [vmem:[%s236 + $0x318] sm:$0xff]
      %v350 = vld [vmem:[%s236 + $0x320] sm:$0xff]
      %v351 = vld [vmem:[%s236 + $0x328] sm:$0xff]
      %v352 = vld [vmem:[%s236 + $0x330] sm:$0xff]
      %v353 = vld [vmem:[%s236 + $0x338] sm:$0xff]
      %v354 = vld [vmem:[%s236 + $0x340] sm:$0xff]
      %v355 = vld [vmem:[%s236 + $0x348] sm:$0xff]
      %v356 = vld [vmem:[%s236 + $0x350] sm:$0xff]
      %v357 = vld [vmem:[%s236 + $0x358] sm:$0xff]
      %v358 = vld [vmem:[%s236 + $0x360] sm:$0xff]
      %v359 = vld [vmem:[%s236 + $0x368] sm:$0xff]
      %v360 = vld [vmem:[%s236 + $0x370] sm:$0xff]
      %v361 = vld [vmem:[%s236 + $0x378] sm:$0xff]
      %v362 = vld [vmem:[%s236 + $0x380] sm:$0xff]
      %v363 = vld [vmem:[%s236 + $0x388] sm:$0xff]
      %v364 = vld [vmem:[%s236 + $0x390] sm:$0xff]
      %v365 = vld [vmem:[%s236 + $0x398] sm:$0xff]
      %v366 = vld [vmem:[%s236 + $0x3a0] sm:$0xff]
      %v367 = vld [vmem:[%s236 + $0x3a8] sm:$0xff]
      %v368 = vld [vmem:[%s236 + $0x3b0] sm:$0xff]
      %v369 = vld [vmem:[%s236 + $0x3b8] sm:$0xff]
      %v370 = vld [vmem:[%s236 + $0x3c0] sm:$0xff]
      %v371 = vld [vmem:[%s236 + $0x3c8] sm:$0xff]
      %v372 = vld [vmem:[%s236 + $0x3d0] sm:$0xff]
      %v373 = vld [vmem:[%s236 + $0x3d8] sm:$0xff]
      %v374 = vld [vmem:[%s236 + $0x3e0] sm:$0xff]
      %v375 = vld [vmem:[%s236 + $0x3e8] sm:$0xff]
      %v376 = vld [vmem:[%s236 + $0x3f0] sm:$0xff]
      %v377 = vld [vmem:[%s236 + $0x3f8] sm:$0xff]
      %v378 = vld [vmem:[%s236 + $0x400] sm:$0xff]
      %v379 = vld [vmem:[%s236 + $0x408] sm:$0xff]
      %v380 = vld [vmem:[%s236 + $0x410] sm:$0xff]
      %v381 = vld [vmem:[%s236 + $0x418] sm:$0xff]
      %v382 = vld [vmem:[%s236 + $0x420] sm:$0xff]
      %v383 = vld [vmem:[%s236 + $0x428] sm:$0xff]
      %v384 = vld [vmem:[%s236 + $0x430] sm:$0xff]
      %v385 = vld [vmem:[%s236 + $0x438] sm:$0xff]
      %v386 = vld [vmem:[%s236 + $0x440] sm:$0xff]
      %v387 = vld [vmem:[%s236 + $0x448] sm:$0xff]
      %v388 = vld [vmem:[%s236 + $0x450] sm:$0xff]
      %v389 = vld [vmem:[%s236 + $0x458] sm:$0xff]
      %v390 = vld [vmem:[%s236 + $0x460] sm:$0xff]
      %v391 = vld [vmem:[%s2] sm:$0xff]
      %v392 = vld [vmem:[%s2 + $0x8] sm:$0xff]
      %v393 = vld [vmem:[%s2 + $0x10] sm:$0xff]
      %v394 = vld [vmem:[%s2 + $0x18] sm:$0xff]
      %v395 = vld [vmem:[%s2 + $0x20] sm:$0xff]
      %v396 = vld [vmem:[%s2 + $0x28] sm:$0xff]
      %v397 = vld [vmem:[%s2 + $0x30] sm:$0xff]
      %v398 = vld [vmem:[%s2 + $0x38] sm:$0xff]
      %v399 = vld [vmem:[%s2 + $0x40] sm:$0xff]
      %v400 = vld [vmem:[%s2 + $0x48] sm:$0xff]
      %v401 = vld [vmem:[%s2 + $0x50] sm:$0xff]
      %v402 = vld [vmem:[%s2 + $0x58] sm:$0xff]
      %v403 = vld [vmem:[%s2 + $0x60] sm:$0xff]
      %v404 = vld [vmem:[%s2 + $0x68] sm:$0xff]
      %v405 = vld [vmem:[%s2 + $0x70] sm:$0xff]
      %v406 = vld [vmem:[%s2 + $0x78] sm:$0xff]
      %v407 = vld [vmem:[%s242] sm:$0xff]
      %v408 = vld [vmem:[%s242 + $0x8] sm:$0xff]
      %v409 = vld [vmem:[%s242 + $0x10] sm:$0xff]
      %v410 = vld [vmem:[%s242 + $0x18] sm:$0xff]
      %v411 = vld [vmem:[%s242 + $0x20] sm:$0xff]
      %v412 = vld [vmem:[%s242 + $0x28] sm:$0xff]
      %v413 = vld [vmem:[%s242 + $0x30] sm:$0xff]
      %v414 = vld [vmem:[%s242 + $0x38] sm:$0xff]
      %v415 = vld [vmem:[%s242 + $0x40] sm:$0xff]
      %v416 = vld [vmem:[%s242 + $0x48] sm:$0xff]
      %v417 = vld [vmem:[%s242 + $0x50] sm:$0xff]
      %v418 = vld [vmem:[%s242 + $0x58] sm:$0xff]
      %v419 = vld [vmem:[%s242 + $0x60] sm:$0xff]
      %v420 = vld [vmem:[%s242 + $0x68] sm:$0xff]
      %v421 = vld [vmem:[%s242 + $0x70] sm:$0xff]
      %v422 = vld [vmem:[%s242 + $0x78] sm:$0xff]
      %v423 = vld [vmem:[%s242 + $0x80] sm:$0xff]
      %v424 = vld [vmem:[%s242 + $0x88] sm:$0xff]
      %v425 = vld [vmem:[%s242 + $0x90] sm:$0xff]
      %v426 = vld [vmem:[%s242 + $0x98] sm:$0xff]
      %v427 = vld [vmem:[%s242 + $0xa0] sm:$0xff]
      %v428 = vld [vmem:[%s242 + $0xa8] sm:$0xff]
      %v429 = vld [vmem:[%s242 + $0xb0] sm:$0xff]
      %v430 = vld [vmem:[%s242 + $0xb8] sm:$0xff]
      %v431 = vld [vmem:[%s242 + $0xc0] sm:$0xff]
      %v432 = vld [vmem:[%s242 + $0xc8] sm:$0xff]
      %v433 = vld [vmem:[%s242 + $0xd0] sm:$0xff]
      %v434 = vld [vmem:[%s242 + $0xd8] sm:$0xff]
      %v435 = vld [vmem:[%s242 + $0xe0] sm:$0xff]
      %v436 = vld [vmem:[%s242 + $0xe8] sm:$0xff]
      %v437 = vld [vmem:[%s242 + $0xf0] sm:$0xff]
      %v438 = vld [vmem:[%s242 + $0xf8] sm:$0xff]
      %v439 = vld [vmem:[%s242 + $0x100] sm:$0xff]
      %v440 = vld [vmem:[%s242 + $0x108] sm:$0xff]
      %v441 = vld [vmem:[%s242 + $0x110] sm:$0xff]
      %v442 = vld [vmem:[%s242 + $0x118] sm:$0xff]
      %v443 = vld [vmem:[%s242 + $0x120] sm:$0xff]
      %v444 = vld [vmem:[%s242 + $0x128] sm:$0xff]
      %v445 = vld [vmem:[%s242 + $0x130] sm:$0xff]
      %v446 = vld [vmem:[%s242 + $0x138] sm:$0xff]
      %v447 = vld [vmem:[%s242 + $0x140] sm:$0xff]
      %v448 = vld [vmem:[%s242 + $0x148] sm:$0xff]
      %v449 = vld [vmem:[%s242 + $0x150] sm:$0xff]
      %v450 = vld [vmem:[%s242 + $0x158] sm:$0xff]
      %v451 = vld [vmem:[%s242 + $0x160] sm:$0xff]
      %v452 = vld [vmem:[%s242 + $0x168] sm:$0xff]
      %v453 = vld [vmem:[%s242 + $0x170] sm:$0xff]
      %v454 = vld [vmem:[%s242 + $0x178] sm:$0xff]
      %v455 = vld [vmem:[%s242 + $0x180] sm:$0xff]
      %v456 = vld [vmem:[%s242 + $0x188] sm:$0xff]
      %v457 = vld [vmem:[%s242 + $0x190] sm:$0xff]
      %v458 = vld [vmem:[%s242 + $0x198] sm:$0xff]
      %v459 = vld [vmem:[%s242 + $0x1a0] sm:$0xff]
      %v460 = vld [vmem:[%s242 + $0x1a8] sm:$0xff]
      %v461 = vld [vmem:[%s242 + $0x1b0] sm:$0xff]
      %v462 = vld [vmem:[%s242 + $0x1b8] sm:$0xff]
      %v463 = vld [vmem:[%s242 + $0x1c0] sm:$0xff]
      %v464 = vld [vmem:[%s242 + $0x1c8] sm:$0xff]
      %v465 = vld [vmem:[%s242 + $0x1d0] sm:$0xff]
      %v466 = vld [vmem:[%s242 + $0x1d8] sm:$0xff]
      %v467 = vld [vmem:[%s242 + $0x1e0] sm:$0xff]
      %v468 = vld [vmem:[%s242 + $0x1e8] sm:$0xff]
      %v469 = vld [vmem:[%s242 + $0x1f0] sm:$0xff]
      %v470 = vld [vmem:[%s242 + $0x1f8] sm:$0xff]
      %v471 = vld [vmem:[%s242 + $0x200] sm:$0xff]
      %v472 = vld [vmem:[%s242 + $0x208] sm:$0xff]
      %v473 = vld [vmem:[%s242 + $0x210] sm:$0xff]
      %v474 = vld [vmem:[%s242 + $0x218] sm:$0xff]
      %v475 = vld [vmem:[%s242 + $0x220] sm:$0xff]
      %v476 = vld [vmem:[%s242 + $0x228] sm:$0xff]
      %v477 = vld [vmem:[%s242 + $0x230] sm:$0xff]
      %v478 = vld [vmem:[%s242 + $0x238] sm:$0xff]
      %v479 = vld [vmem:[%s242 + $0x240] sm:$0xff]
      %v480 = vld [vmem:[%s242 + $0x248] sm:$0xff]
      %v481 = vld [vmem:[%s242 + $0x250] sm:$0xff]
      %v482 = vld [vmem:[%s242 + $0x258] sm:$0xff]
      %v483 = vld [vmem:[%s242 + $0x260] sm:$0xff]
      %v484 = vld [vmem:[%s242 + $0x268] sm:$0xff]
      %v485 = vld [vmem:[%s242 + $0x270] sm:$0xff]
      %v486 = vld [vmem:[%s242 + $0x278] sm:$0xff]
      %v487 = vld [vmem:[%s242 + $0x280] sm:$0xff]
      %v488 = vld [vmem:[%s242 + $0x288] sm:$0xff]
      %v489 = vld [vmem:[%s242 + $0x290] sm:$0xff]
      %v490 = vld [vmem:[%s242 + $0x298] sm:$0xff]
      %v491 = vld [vmem:[%s242 + $0x2a0] sm:$0xff]
      %v492 = vld [vmem:[%s242 + $0x2a8] sm:$0xff]
      %v493 = vld [vmem:[%s242 + $0x2b0] sm:$0xff]
      %v494 = vld [vmem:[%s242 + $0x2b8] sm:$0xff]
      %v495 = vld [vmem:[%s242 + $0x2c0] sm:$0xff]
      %v496 = vld [vmem:[%s242 + $0x2c8] sm:$0xff]
      %v497 = vld [vmem:[%s242 + $0x2d0] sm:$0xff]
      %v498 = vld [vmem:[%s242 + $0x2d8] sm:$0xff]
      %v499 = vld [vmem:[%s242 + $0x2e0] sm:$0xff]
      %v500 = vld [vmem:[%s242 + $0x2e8] sm:$0xff]
      %v501 = vld [vmem:[%s242 + $0x2f0] sm:$0xff]
      %v502 = vld [vmem:[%s242 + $0x2f8] sm:$0xff]
      %v503 = vld [vmem:[%s242 + $0x300] sm:$0xff]
      %v504 = vld [vmem:[%s242 + $0x308] sm:$0xff]
      %v505 = vld [vmem:[%s242 + $0x310] sm:$0xff]
      %v506 = vld [vmem:[%s242 + $0x318] sm:$0xff]
      %v507 = vld [vmem:[%s242 + $0x320] sm:$0xff]
      %v508 = vld [vmem:[%s242 + $0x328] sm:$0xff]
      %v509 = vld [vmem:[%s242 + $0x330] sm:$0xff]
      %v510 = vld [vmem:[%s242 + $0x338] sm:$0xff]
      %v511 = vld [vmem:[%s242 + $0x340] sm:$0xff]
      %v512 = vld [vmem:[%s242 + $0x348] sm:$0xff]
      %v513 = vld [vmem:[%s242 + $0x350] sm:$0xff]
      %v514 = vld [vmem:[%s242 + $0x358] sm:$0xff]
      %v515 = vld [vmem:[%s242 + $0x360] sm:$0xff]
      %v516 = vld [vmem:[%s242 + $0x368] sm:$0xff]
      %v517 = vld [vmem:[%s242 + $0x370] sm:$0xff]
      %v518 = vld [vmem:[%s242 + $0x378] sm:$0xff]
      %v519 = vld [vmem:[%s242 + $0x380] sm:$0xff]
      %v520 = vld [vmem:[%s242 + $0x388] sm:$0xff]
      %v521 = vld [vmem:[%s242 + $0x390] sm:$0xff]
      %v522 = vld [vmem:[%s242 + $0x398] sm:$0xff]
      %v523 = vld [vmem:[%s242 + $0x3a0] sm:$0xff]
      %v524 = vld [vmem:[%s242 + $0x3a8] sm:$0xff]
      %v525 = vld [vmem:[%s242 + $0x3b0] sm:$0xff]
      %v526 = vld [vmem:[%s242 + $0x3b8] sm:$0xff]
      %v527 = vld [vmem:[%s242 + $0x3c0] sm:$0xff]
      %v528 = vld [vmem:[%s242 + $0x3c8] sm:$0xff]
      %v529 = vld [vmem:[%s242 + $0x3d0] sm:$0xff]
      %v530 = vld [vmem:[%s242 + $0x3d8] sm:$0xff]
      %v531 = vld [vmem:[%s242 + $0x3e0] sm:$0xff]
      %v532 = vld [vmem:[%s242 + $0x3e8] sm:$0xff]
      %v533 = vld [vmem:[%s242 + $0x3f0] sm:$0xff]
      %v534 = vld [vmem:[%s242 + $0x3f8] sm:$0xff]
      %v535 = vld [vmem:[%s242 + $0x400] sm:$0xff]
      %v536 = vld [vmem:[%s242 + $0x408] sm:$0xff]
      %v537 = vld [vmem:[%s242 + $0x410] sm:$0xff]
      %v538 = vld [vmem:[%s242 + $0x418] sm:$0xff]
      %v539 = vld [vmem:[%s242 + $0x420] sm:$0xff]
      %v540 = vld [vmem:[%s242 + $0x428] sm:$0xff]
      %v541 = vld [vmem:[%s242 + $0x430] sm:$0xff]
      %v542 = vld [vmem:[%s242 + $0x438] sm:$0xff]
      %v543 = vld [vmem:[%s242 + $0x440] sm:$0xff]
      %v544 = vld [vmem:[%s242 + $0x448] sm:$0xff]
      %v545 = vld [vmem:[%s242 + $0x450] sm:$0xff]
      %v546 = vld [vmem:[%s242 + $0x458] sm:$0xff]
      %v547 = vld [vmem:[%s242 + $0x460] sm:$0xff]
      %v548 = vld [vmem:[%s3] sm:$0xff]
      %v549 = vld [vmem:[%s3 + $0x8] sm:$0xff]
      %v550 = vld [vmem:[%s3 + $0x10] sm:$0xff]
      %v551 = vld [vmem:[%s3 + $0x18] sm:$0xff]
      %v552 = vld [vmem:[%s3 + $0x20] sm:$0xff]
      %v553 = vld [vmem:[%s3 + $0x28] sm:$0xff]
      %v554 = vld [vmem:[%s3 + $0x30] sm:$0xff]
      %v555 = vld [vmem:[%s3 + $0x38] sm:$0xff]
      %v556 = vld [vmem:[%s3 + $0x40] sm:$0xff]
      %v557 = vld [vmem:[%s3 + $0x48] sm:$0xff]
      %v558 = vld [vmem:[%s3 + $0x50] sm:$0xff]
      %v559 = vld [vmem:[%s3 + $0x58] sm:$0xff]
      %v560 = vld [vmem:[%s3 + $0x60] sm:$0xff]
      %v561 = vld [vmem:[%s3 + $0x68] sm:$0xff]
      %v562 = vld [vmem:[%s3 + $0x70] sm:$0xff]
      %v563 = vld [vmem:[%s3 + $0x78] sm:$0xff]
      %564 = vmatprep.subr.mxu0 0.0
      %565 = vmatpush1.msra.mxu0 %v563
      %566 = vmatprep.subr.mxu0 0.0
      %567 = vmatpush1.msra.mxu0 %v562
      %568 = vmatprep.subr.mxu0 0.0
      %569 = vmatpush1.msra.mxu0 %v561
      %570 = vmatprep.subr.mxu0 0.0
      %571 = vmatpush1.msra.mxu0 %v560
      %572 = vmatprep.subr.mxu0 0.0
      %573 = vmatpush1.msra.mxu0 %v559
      %574 = vmatprep.subr.mxu0 0.0
      %575 = vmatpush1.msra.mxu0 %v558
      %576 = vmatprep.subr.mxu0 0.0
      %577 = vmatpush1.msra.mxu0 %v557
      %578 = vmatprep.subr.mxu0 0.0
      %579 = vmatpush1.msra.mxu0 %v556
      %580 = vmatprep.subr.mxu0 0.0
      %581 = vmatpush1.msra.mxu0 %v555
      %582 = vmatprep.subr.mxu0 0.0
      %583 = vmatpush1.msra.mxu0 %v554
      %584 = vmatprep.subr.mxu0 0.0
      %585 = vmatpush1.msra.mxu0 %v553
      %586 = vmatprep.subr.mxu0 0.0
      %587 = vmatpush1.msra.mxu0 %v552
      %588 = vmatprep.subr.mxu0 0.0
      %589 = vmatpush1.msra.mxu0 %v551
      %590 = vmatprep.subr.mxu0 0.0
      %591 = vmatpush1.msra.mxu0 %v550
      %592 = vmatprep.subr.mxu0 0.0
      %593 = vmatpush1.msra.mxu0 %v549
      %594 = vmatprep.subr.mxu0 0.0
      %595 = vmatpush1.msra.mxu0 %v548
      %596 = vmatprep.subr.mxu0 0.0
      %597 = vmatpush2.msra.mxu0 0.0
      %598 = vmatprep.subr.mxu0 0.0
      %599 = vmatpush2.msra.mxu0 0.0
      %600 = vmatprep.subr.mxu0 0.0
      %601 = vmatpush2.msra.mxu0 0.0
      %602 = vmatprep.subr.mxu0 0.0
      %603 = vmatpush2.msra.mxu0 0.0
      %604 = vmatprep.subr.mxu0 0.0
      %605 = vmatpush2.msra.mxu0 0.0
      %606 = vmatprep.subr.mxu0 0.0
      %607 = vmatpush2.msra.mxu0 0.0
      %608 = vmatprep.subr.mxu0 0.0
      %609 = vmatpush2.msra.mxu0 0.0
      %610 = vmatprep.subr.mxu0 0.0
      %611 = vmatpush2.msra.mxu0 0.0
      %612 = vmatprep.subr.mxu0 0.0
      %613 = vmatpush2.msra.mxu0 0.0
      %614 = vmatprep.subr.mxu0 0.0
      %615 = vmatpush2.msra.mxu0 0.0
      %616 = vmatprep.subr.mxu0 0.0
      %617 = vmatpush2.msra.mxu0 0.0
      %618 = vmatprep.subr.mxu0 0.0
      %619 = vmatpush2.msra.mxu0 0.0
      %620 = vmatprep.subr.mxu0 0.0
      %621 = vmatpush2.msra.mxu0 0.0
      %622 = vmatprep.subr.mxu0 0.0
      %623 = vmatpush2.msra.mxu0 0.0
      %624 = vmatprep.subr.mxu0 0.0
      %625 = vmatpush2.msra.mxu0 0.0
      %626 = vmatprep.subr.mxu0 0.0
      %627 = vmatpush2.msra.mxu0 0.0
      %628 = vmatprep.mubr.f32.mxu0 0.0
      %629 = vmatmul.mubr.f32.gmra.mxu0 %v407
      %v630 = vpop.f32.mrf.mxu0
      %v631 = vadd.f32 0.0, %v630
      %v632 = vpop.f32.mrf.mxu0
      %633 = vmatprep.mubr.f32.mxu0 0.0
      %634 = vmatmul.mubr.f32.gmra.mxu0 %v408
      %v635 = vpop.f32.mrf.mxu0
      %v636 = vadd.f32 0.0, %v635
      %v637 = vpop.f32.mrf.mxu0
      %638 = vmatprep.mubr.f32.mxu0 0.0
      %639 = vmatmul.mubr.f32.gmra.mxu0 %v409
      %v640 = vpop.f32.mrf.mxu0
      %v641 = vadd.f32 0.0, %v640
      %v642 = vpop.f32.mrf.mxu0
      %643 = vmatprep.mubr.f32.mxu0 0.0
      %644 = vmatmul.mubr.f32.gmra.mxu0 %v410
      %v645 = vpop.f32.mrf.mxu0
      %v646 = vadd.f32 0.0, %v645
      %v647 = vpop.f32.mrf.mxu0
      %648 = vmatprep.mubr.f32.mxu0 0.0
      %649 = vmatmul.mubr.f32.gmra.mxu0 %v411
      %v650 = vpop.f32.mrf.mxu0
      %v651 = vadd.f32 0.0, %v650
      %v652 = vpop.f32.mrf.mxu0
      %653 = vmatprep.mubr.f32.mxu0 0.0
      %654 = vmatmul.mubr.f32.gmra.mxu0 %v412
      %v655 = vpop.f32.mrf.mxu0
      %v656 = vadd.f32 0.0, %v655
      %v657 = vpop.f32.mrf.mxu0
      %658 = vmatprep.mubr.f32.mxu0 0.0
      %659 = vmatmul.mubr.f32.gmra.mxu0 %v413
      %v660 = vpop.f32.mrf.mxu0
      %v661 = vadd.f32 0.0, %v660
      %v662 = vpop.f32.mrf.mxu0
      %663 = vmatprep.mubr.f32.mxu0 0.0
      %664 = vmatmul.mubr.f32.gmra.mxu0 %v414
      %v665 = vpop.f32.mrf.mxu0
      %v666 = vadd.f32 0.0, %v665
      %v667 = vpop.f32.mrf.mxu0
      %668 = vmatprep.mubr.f32.mxu0 0.0
      %669 = vmatmul.mubr.f32.gmra.mxu0 %v415
      %v670 = vpop.f32.mrf.mxu0
      %v671 = vadd.f32 0.0, %v670
      %v672 = vpop.f32.mrf.mxu0
      %673 = vmatprep.mubr.f32.mxu0 0.0
      %674 = vmatmul.mubr.f32.gmra.mxu0 %v416
      %v675 = vpop.f32.mrf.mxu0
      %v676 = vadd.f32 0.0, %v675
      %v677 = vpop.f32.mrf.mxu0
      %678 = vmatprep.mubr.f32.mxu0 0.0
      %679 = vmatmul.mubr.f32.gmra.mxu0 %v417
      %v680 = vpop.f32.mrf.mxu0
      %v681 = vadd.f32 0.0, %v680
      %v682 = vpop.f32.mrf.mxu0
      %683 = vmatprep.mubr.f32.mxu0 0.0
      %684 = vmatmul.mubr.f32.gmra.mxu0 %v418
      %v685 = vpop.f32.mrf.mxu0
      %v686 = vadd.f32 0.0, %v685
      %v687 = vpop.f32.mrf.mxu0
      %688 = vmatprep.mubr.f32.mxu0 0.0
      %689 = vmatmul.mubr.f32.gmra.mxu0 %v419
      %v690 = vpop.f32.mrf.mxu0
      %v691 = vadd.f32 0.0, %v690
      %v692 = vpop.f32.mrf.mxu0
      %693 = vmatprep.mubr.f32.mxu0 0.0
      %694 = vmatmul.mubr.f32.gmra.mxu0 %v420
      %v695 = vpop.f32.mrf.mxu0
      %v696 = vadd.f32 0.0, %v695
      %v697 = vpop.f32.mrf.mxu0
      %698 = vmatprep.mubr.f32.mxu0 0.0
      %699 = vmatmul.mubr.f32.gmra.mxu0 %v421
      %v700 = vpop.f32.mrf.mxu0
      %v701 = vadd.f32 0.0, %v700
      %v702 = vpop.f32.mrf.mxu0
      %703 = vmatprep.mubr.f32.mxu0 0.0
      %704 = vmatmul.mubr.f32.gmra.mxu0 %v422
      %v705 = vpop.f32.mrf.mxu0
      %v706 = vadd.f32 0.0, %v705
      %v707 = vpop.f32.mrf.mxu0
      %708 = vmatprep.mubr.f32.mxu0 0.0
      %709 = vmatmul.mubr.f32.gmra.mxu0 %v423
      %v710 = vpop.f32.mrf.mxu0
      %v711 = vadd.f32 0.0, %v710
      %v712 = vpop.f32.mrf.mxu0
      %713 = vmatprep.mubr.f32.mxu0 0.0
      %714 = vmatmul.mubr.f32.gmra.mxu0 %v424
      %v715 = vpop.f32.mrf.mxu0
      %v716 = vadd.f32 0.0, %v715
      %v717 = vpop.f32.mrf.mxu0
      %718 = vmatprep.mubr.f32.mxu0 0.0
      %719 = vmatmul.mubr.f32.gmra.mxu0 %v425
      %v720 = vpop.f32.mrf.mxu0
      %v721 = vadd.f32 0.0, %v720
      %v722 = vpop.f32.mrf.mxu0
      %723 = vmatprep.mubr.f32.mxu0 0.0
      %724 = vmatmul.mubr.f32.gmra.mxu0 %v426
      %v725 = vpop.f32.mrf.mxu0
      %v726 = vadd.f32 0.0, %v725
      %v727 = vpop.f32.mrf.mxu0
      %728 = vmatprep.mubr.f32.mxu0 0.0
      %729 = vmatmul.mubr.f32.gmra.mxu0 %v427
      %v730 = vpop.f32.mrf.mxu0
      %v731 = vadd.f32 0.0, %v730
      %v732 = vpop.f32.mrf.mxu0
      %733 = vmatprep.mubr.f32.mxu0 0.0
      %734 = vmatmul.mubr.f32.gmra.mxu0 %v428
      %v735 = vpop.f32.mrf.mxu0
      %v736 = vadd.f32 0.0, %v735
      %v737 = vpop.f32.mrf.mxu0
      %738 = vmatprep.mubr.f32.mxu0 0.0
      %739 = vmatmul.mubr.f32.gmra.mxu0 %v429
      %v740 = vpop.f32.mrf.mxu0
      %v741 = vadd.f32 0.0, %v740
      %v742 = vpop.f32.mrf.mxu0
      %743 = vmatprep.mubr.f32.mxu0 0.0
      %744 = vmatmul.mubr.f32.gmra.mxu0 %v430
      %v745 = vpop.f32.mrf.mxu0
      %v746 = vadd.f32 0.0, %v745
      %v747 = vpop.f32.mrf.mxu0
      %748 = vmatprep.mubr.f32.mxu0 0.0
      %749 = vmatmul.mubr.f32.gmra.mxu0 %v431
      %v750 = vpop.f32.mrf.mxu0
      %v751 = vadd.f32 0.0, %v750
      %v752 = vpop.f32.mrf.mxu0
      %753 = vmatprep.mubr.f32.mxu0 0.0
      %754 = vmatmul.mubr.f32.gmra.mxu0 %v432
      %v755 = vpop.f32.mrf.mxu0
      %v756 = vadd.f32 0.0, %v755
      %v757 = vpop.f32.mrf.mxu0
      %758 = vmatprep.mubr.f32.mxu0 0.0
      %759 = vmatmul.mubr.f32.gmra.mxu0 %v433
      %v760 = vpop.f32.mrf.mxu0
      %v761 = vadd.f32 0.0, %v760
      %v762 = vpop.f32.mrf.mxu0
      %763 = vmatprep.mubr.f32.mxu0 0.0
      %764 = vmatmul.mubr.f32.gmra.mxu0 %v434
      %v765 = vpop.f32.mrf.mxu0
      %v766 = vadd.f32 0.0, %v765
      %v767 = vpop.f32.mrf.mxu0
      %768 = vmatprep.mubr.f32.mxu0 0.0
      %769 = vmatmul.mubr.f32.gmra.mxu0 %v435
      %v770 = vpop.f32.mrf.mxu0
      %v771 = vadd.f32 0.0, %v770
      %v772 = vpop.f32.mrf.mxu0
      %773 = vmatprep.mubr.f32.mxu0 0.0
      %774 = vmatmul.mubr.f32.gmra.mxu0 %v436
      %v775 = vpop.f32.mrf.mxu0
      %v776 = vadd.f32 0.0, %v775
      %v777 = vpop.f32.mrf.mxu0
      %778 = vmatprep.mubr.f32.mxu0 0.0
      %779 = vmatmul.mubr.f32.gmra.mxu0 %v437
      %v780 = vpop.f32.mrf.mxu0
      %v781 = vadd.f32 0.0, %v780
      %v782 = vpop.f32.mrf.mxu0
      %783 = vmatprep.mubr.f32.mxu0 0.0
      %784 = vmatmul.mubr.f32.gmra.mxu0 %v438
      %v785 = vpop.f32.mrf.mxu0
      %v786 = vadd.f32 0.0, %v785
      %v787 = vpop.f32.mrf.mxu0
      %788 = vmatprep.mubr.f32.mxu0 0.0
      %789 = vmatmul.mubr.f32.gmra.mxu0 %v439
      %v790 = vpop.f32.mrf.mxu0
      %v791 = vadd.f32 0.0, %v790
      %v792 = vpop.f32.mrf.mxu0
      %793 = vmatprep.mubr.f32.mxu0 0.0
      %794 = vmatmul.mubr.f32.gmra.mxu0 %v440
      %v795 = vpop.f32.mrf.mxu0
      %v796 = vadd.f32 0.0, %v795
      %v797 = vpop.f32.mrf.mxu0
      %798 = vmatprep.mubr.f32.mxu0 0.0
      %799 = vmatmul.mubr.f32.gmra.mxu0 %v441
      %v800 = vpop.f32.mrf.mxu0
      %v801 = vadd.f32 0.0, %v800
      %v802 = vpop.f32.mrf.mxu0
      %803 = vmatprep.mubr.f32.mxu0 0.0
      %804 = vmatmul.mubr.f32.gmra.mxu0 %v442
      %v805 = vpop.f32.mrf.mxu0
      %v806 = vadd.f32 0.0, %v805
      %v807 = vpop.f32.mrf.mxu0
      %808 = vmatprep.mubr.f32.mxu0 0.0
      %809 = vmatmul.mubr.f32.gmra.mxu0 %v443
      %v810 = vpop.f32.mrf.mxu0
      %v811 = vadd.f32 0.0, %v810
      %v812 = vpop.f32.mrf.mxu0
      %813 = vmatprep.mubr.f32.mxu0 0.0
      %814 = vmatmul.mubr.f32.gmra.mxu0 %v444
      %v815 = vpop.f32.mrf.mxu0
      %v816 = vadd.f32 0.0, %v815
      %v817 = vpop.f32.mrf.mxu0
      %818 = vmatprep.mubr.f32.mxu0 0.0
      %819 = vmatmul.mubr.f32.gmra.mxu0 %v445
      %v820 = vpop.f32.mrf.mxu0
      %v821 = vadd.f32 0.0, %v820
      %v822 = vpop.f32.mrf.mxu0
      %823 = vmatprep.mubr.f32.mxu0 0.0
      %824 = vmatmul.mubr.f32.gmra.mxu0 %v446
      %v825 = vpop.f32.mrf.mxu0
      %v826 = vadd.f32 0.0, %v825
      %v827 = vpop.f32.mrf.mxu0
      %828 = vmatprep.mubr.f32.mxu0 0.0
      %829 = vmatmul.mubr.f32.gmra.mxu0 %v447
      %v830 = vpop.f32.mrf.mxu0
      %v831 = vadd.f32 0.0, %v830
      %v832 = vpop.f32.mrf.mxu0
      %833 = vmatprep.mubr.f32.mxu0 0.0
      %834 = vmatmul.mubr.f32.gmra.mxu0 %v448
      %v835 = vpop.f32.mrf.mxu0
      %v836 = vadd.f32 0.0, %v835
      %v837 = vpop.f32.mrf.mxu0
      %838 = vmatprep.mubr.f32.mxu0 0.0
      %839 = vmatmul.mubr.f32.gmra.mxu0 %v449
      %v840 = vpop.f32.mrf.mxu0
      %v841 = vadd.f32 0.0, %v840
      %v842 = vpop.f32.mrf.mxu0
      %843 = vmatprep.mubr.f32.mxu0 0.0
      %844 = vmatmul.mubr.f32.gmra.mxu0 %v450
      %v845 = vpop.f32.mrf.mxu0
      %v846 = vadd.f32 0.0, %v845
      %v847 = vpop.f32.mrf.mxu0
      %848 = vmatprep.mubr.f32.mxu0 0.0
      %849 = vmatmul.mubr.f32.gmra.mxu0 %v451
      %v850 = vpop.f32.mrf.mxu0
      %v851 = vadd.f32 0.0, %v850
      %v852 = vpop.f32.mrf.mxu0
      %853 = vmatprep.mubr.f32.mxu0 0.0
      %854 = vmatmul.mubr.f32.gmra.mxu0 %v452
      %v855 = vpop.f32.mrf.mxu0
      %v856 = vadd.f32 0.0, %v855
      %v857 = vpop.f32.mrf.mxu0
      %858 = vmatprep.mubr.f32.mxu0 0.0
      %859 = vmatmul.mubr.f32.gmra.mxu0 %v453
      %v860 = vpop.f32.mrf.mxu0
      %v861 = vadd.f32 0.0, %v860
      %v862 = vpop.f32.mrf.mxu0
      %863 = vmatprep.mubr.f32.mxu0 0.0
      %864 = vmatmul.mubr.f32.gmra.mxu0 %v454
      %v865 = vpop.f32.mrf.mxu0
      %v866 = vadd.f32 0.0, %v865
      %v867 = vpop.f32.mrf.mxu0
      %868 = vmatprep.mubr.f32.mxu0 0.0
      %869 = vmatmul.mubr.f32.gmra.mxu0 %v455
      %v870 = vpop.f32.mrf.mxu0
      %v871 = vadd.f32 0.0, %v870
      %v872 = vpop.f32.mrf.mxu0
      %873 = vmatprep.mubr.f32.mxu0 0.0
      %874 = vmatmul.mubr.f32.gmra.mxu0 %v456
      %v875 = vpop.f32.mrf.mxu0
      %v876 = vadd.f32 0.0, %v875
      %v877 = vpop.f32.mrf.mxu0
      %878 = vmatprep.mubr.f32.mxu0 0.0
      %879 = vmatmul.mubr.f32.gmra.mxu0 %v457
      %v880 = vpop.f32.mrf.mxu0
      %v881 = vadd.f32 0.0, %v880
      %v882 = vpop.f32.mrf.mxu0
      %883 = vmatprep.mubr.f32.mxu0 0.0
      %884 = vmatmul.mubr.f32.gmra.mxu0 %v458
      %v885 = vpop.f32.mrf.mxu0
      %v886 = vadd.f32 0.0, %v885
      %v887 = vpop.f32.mrf.mxu0
      %888 = vmatprep.mubr.f32.mxu0 0.0
      %889 = vmatmul.mubr.f32.gmra.mxu0 %v459
      %v890 = vpop.f32.mrf.mxu0
      %v891 = vadd.f32 0.0, %v890
      %v892 = vpop.f32.mrf.mxu0
      %893 = vmatprep.mubr.f32.mxu0 0.0
      %894 = vmatmul.mubr.f32.gmra.mxu0 %v460
      %v895 = vpop.f32.mrf.mxu0
      %v896 = vadd.f32 0.0, %v895
      %v897 = vpop.f32.mrf.mxu0
      %898 = vmatprep.mubr.f32.mxu0 0.0
      %899 = vmatmul.mubr.f32.gmra.mxu0 %v461
      %v900 = vpop.f32.mrf.mxu0
      %v901 = vadd.f32 0.0, %v900
      %v902 = vpop.f32.mrf.mxu0
      %903 = vmatprep.mubr.f32.mxu0 0.0
      %904 = vmatmul.mubr.f32.gmra.mxu0 %v462
      %v905 = vpop.f32.mrf.mxu0
      %v906 = vadd.f32 0.0, %v905
      %v907 = vpop.f32.mrf.mxu0
      %908 = vmatprep.mubr.f32.mxu0 0.0
      %909 = vmatmul.mubr.f32.gmra.mxu0 %v463
      %v910 = vpop.f32.mrf.mxu0
      %v911 = vadd.f32 0.0, %v910
      %v912 = vpop.f32.mrf.mxu0
      %913 = vmatprep.mubr.f32.mxu0 0.0
      %914 = vmatmul.mubr.f32.gmra.mxu0 %v464
      %v915 = vpop.f32.mrf.mxu0
      %v916 = vadd.f32 0.0, %v915
      %v917 = vpop.f32.mrf.mxu0
      %918 = vmatprep.mubr.f32.mxu0 0.0
      %919 = vmatmul.mubr.f32.gmra.mxu0 %v465
      %v920 = vpop.f32.mrf.mxu0
      %v921 = vadd.f32 0.0, %v920
      %v922 = vpop.f32.mrf.mxu0
      %923 = vmatprep.mubr.f32.mxu0 0.0
      %924 = vmatmul.mubr.f32.gmra.mxu0 %v466
      %v925 = vpop.f32.mrf.mxu0
      %v926 = vadd.f32 0.0, %v925
      %v927 = vpop.f32.mrf.mxu0
      %928 = vmatprep.mubr.f32.mxu0 0.0
      %929 = vmatmul.mubr.f32.gmra.mxu0 %v467
      %v930 = vpop.f32.mrf.mxu0
      %v931 = vadd.f32 0.0, %v930
      %v932 = vpop.f32.mrf.mxu0
      %933 = vmatprep.mubr.f32.mxu0 0.0
      %934 = vmatmul.mubr.f32.gmra.mxu0 %v468
      %v935 = vpop.f32.mrf.mxu0
      %v936 = vadd.f32 0.0, %v935
      %v937 = vpop.f32.mrf.mxu0
      %938 = vmatprep.mubr.f32.mxu0 0.0
      %939 = vmatmul.mubr.f32.gmra.mxu0 %v469
      %v940 = vpop.f32.mrf.mxu0
      %v941 = vadd.f32 0.0, %v940
      %v942 = vpop.f32.mrf.mxu0
      %943 = vmatprep.mubr.f32.mxu0 0.0
      %944 = vmatmul.mubr.f32.gmra.mxu0 %v470
      %v945 = vpop.f32.mrf.mxu0
      %v946 = vadd.f32 0.0, %v945
      %v947 = vpop.f32.mrf.mxu0
      %948 = vmatprep.mubr.f32.mxu0 0.0
      %949 = vmatmul.mubr.f32.gmra.mxu0 %v471
      %v950 = vpop.f32.mrf.mxu0
      %v951 = vadd.f32 0.0, %v950
      %v952 = vpop.f32.mrf.mxu0
      %953 = vmatprep.mubr.f32.mxu0 0.0
      %954 = vmatmul.mubr.f32.gmra.mxu0 %v472
      %v955 = vpop.f32.mrf.mxu0
      %v956 = vadd.f32 0.0, %v955
      %v957 = vpop.f32.mrf.mxu0
      %958 = vmatprep.mubr.f32.mxu0 0.0
      %959 = vmatmul.mubr.f32.gmra.mxu0 %v473
      %v960 = vpop.f32.mrf.mxu0
      %v961 = vadd.f32 0.0, %v960
      %v962 = vpop.f32.mrf.mxu0
      %963 = vmatprep.mubr.f32.mxu0 0.0
      %964 = vmatmul.mubr.f32.gmra.mxu0 %v474
      %v965 = vpop.f32.mrf.mxu0
      %v966 = vadd.f32 0.0, %v965
      %v967 = vpop.f32.mrf.mxu0
      %968 = vmatprep.mubr.f32.mxu0 0.0
      %969 = vmatmul.mubr.f32.gmra.mxu0 %v475
      %v970 = vpop.f32.mrf.mxu0
      %v971 = vadd.f32 0.0, %v970
      %v972 = vpop.f32.mrf.mxu0
      %973 = vmatprep.mubr.f32.mxu0 0.0
      %974 = vmatmul.mubr.f32.gmra.mxu0 %v476
      %v975 = vpop.f32.mrf.mxu0
      %v976 = vadd.f32 0.0, %v975
      %v977 = vpop.f32.mrf.mxu0
      %978 = vmatprep.mubr.f32.mxu0 0.0
      %979 = vmatmul.mubr.f32.gmra.mxu0 %v477
      %v980 = vpop.f32.mrf.mxu0
      %v981 = vadd.f32 0.0, %v980
      %v982 = vpop.f32.mrf.mxu0
      %983 = vmatprep.mubr.f32.mxu0 0.0
      %984 = vmatmul.mubr.f32.gmra.mxu0 %v478
      %v985 = vpop.f32.mrf.mxu0
      %v986 = vadd.f32 0.0, %v985
      %v987 = vpop.f32.mrf.mxu0
      %988 = vmatprep.mubr.f32.mxu0 0.0
      %989 = vmatmul.mubr.f32.gmra.mxu0 %v479
      %v990 = vpop.f32.mrf.mxu0
      %v991 = vadd.f32 0.0, %v990
      %v992 = vpop.f32.mrf.mxu0
      %993 = vmatprep.mubr.f32.mxu0 0.0
      %994 = vmatmul.mubr.f32.gmra.mxu0 %v480
      %v995 = vpop.f32.mrf.mxu0
      %v996 = vadd.f32 0.0, %v995
      %v997 = vpop.f32.mrf.mxu0
      %998 = vmatprep.mubr.f32.mxu0 0.0
      %999 = vmatmul.mubr.f32.gmra.mxu0 %v481
      %v1000 = vpop.f32.mrf.mxu0
      %v1001 = vadd.f32 0.0, %v1000
      %v1002 = vpop.f32.mrf.mxu0
      %1003 = vmatprep.mubr.f32.mxu0 0.0
      %1004 = vmatmul.mubr.f32.gmra.mxu0 %v482
      %v1005 = vpop.f32.mrf.mxu0
      %v1006 = vadd.f32 0.0, %v1005
      %v1007 = vpop.f32.mrf.mxu0
      %1008 = vmatprep.mubr.f32.mxu0 0.0
      %1009 = vmatmul.mubr.f32.gmra.mxu0 %v483
      %v1010 = vpop.f32.mrf.mxu0
      %v1011 = vadd.f32 0.0, %v1010
      %v1012 = vpop.f32.mrf.mxu0
      %1013 = vmatprep.mubr.f32.mxu0 0.0
      %1014 = vmatmul.mubr.f32.gmra.mxu0 %v484
      %v1015 = vpop.f32.mrf.mxu0
      %v1016 = vadd.f32 0.0, %v1015
      %v1017 = vpop.f32.mrf.mxu0
      %1018 = vmatprep.mubr.f32.mxu0 0.0
      %1019 = vmatmul.mubr.f32.gmra.mxu0 %v485
      %v1020 = vpop.f32.mrf.mxu0
      %v1021 = vadd.f32 0.0, %v1020
      %v1022 = vpop.f32.mrf.mxu0
      %1023 = vmatprep.mubr.f32.mxu0 0.0
      %1024 = vmatmul.mubr.f32.gmra.mxu0 %v486
      %v1025 = vpop.f32.mrf.mxu0
      %v1026 = vadd.f32 0.0, %v1025
      %v1027 = vpop.f32.mrf.mxu0
      %1028 = vmatprep.mubr.f32.mxu0 0.0
      %1029 = vmatmul.mubr.f32.gmra.mxu0 %v487
      %v1030 = vpop.f32.mrf.mxu0
      %v1031 = vadd.f32 0.0, %v1030
      %v1032 = vpop.f32.mrf.mxu0
      %1033 = vmatprep.mubr.f32.mxu0 0.0
      %1034 = vmatmul.mubr.f32.gmra.mxu0 %v488
      %v1035 = vpop.f32.mrf.mxu0
      %v1036 = vadd.f32 0.0, %v1035
      %v1037 = vpop.f32.mrf.mxu0
      %1038 = vmatprep.mubr.f32.mxu0 0.0
      %1039 = vmatmul.mubr.f32.gmra.mxu0 %v489
      %v1040 = vpop.f32.mrf.mxu0
      %v1041 = vadd.f32 0.0, %v1040
      %v1042 = vpop.f32.mrf.mxu0
      %1043 = vmatprep.mubr.f32.mxu0 0.0
      %1044 = vmatmul.mubr.f32.gmra.mxu0 %v490
      %v1045 = vpop.f32.mrf.mxu0
      %v1046 = vadd.f32 0.0, %v1045
      %v1047 = vpop.f32.mrf.mxu0
      %1048 = vmatprep.mubr.f32.mxu0 0.0
      %1049 = vmatmul.mubr.f32.gmra.mxu0 %v491
      %v1050 = vpop.f32.mrf.mxu0
      %v1051 = vadd.f32 0.0, %v1050
      %v1052 = vpop.f32.mrf.mxu0
      %1053 = vmatprep.mubr.f32.mxu0 0.0
      %1054 = vmatmul.mubr.f32.gmra.mxu0 %v492
      %v1055 = vpop.f32.mrf.mxu0
      %v1056 = vadd.f32 0.0, %v1055
      %v1057 = vpop.f32.mrf.mxu0
      %1058 = vmatprep.mubr.f32.mxu0 0.0
      %1059 = vmatmul.mubr.f32.gmra.mxu0 %v493
      %v1060 = vpop.f32.mrf.mxu0
      %v1061 = vadd.f32 0.0, %v1060
      %v1062 = vpop.f32.mrf.mxu0
      %1063 = vmatprep.mubr.f32.mxu0 0.0
      %1064 = vmatmul.mubr.f32.gmra.mxu0 %v494
      %v1065 = vpop.f32.mrf.mxu0
      %v1066 = vadd.f32 0.0, %v1065
      %v1067 = vpop.f32.mrf.mxu0
      %1068 = vmatprep.mubr.f32.mxu0 0.0
      %1069 = vmatmul.mubr.f32.gmra.mxu0 %v495
      %v1070 = vpop.f32.mrf.mxu0
      %v1071 = vadd.f32 0.0, %v1070
      %v1072 = vpop.f32.mrf.mxu0
      %1073 = vmatprep.mubr.f32.mxu0 0.0
      %1074 = vmatmul.mubr.f32.gmra.mxu0 %v496
      %v1075 = vpop.f32.mrf.mxu0
      %v1076 = vadd.f32 0.0, %v1075
      %v1077 = vpop.f32.mrf.mxu0
      %1078 = vmatprep.mubr.f32.mxu0 0.0
      %1079 = vmatmul.mubr.f32.gmra.mxu0 %v497
      %v1080 = vpop.f32.mrf.mxu0
      %v1081 = vadd.f32 0.0, %v1080
      %v1082 = vpop.f32.mrf.mxu0
      %1083 = vmatprep.mubr.f32.mxu0 0.0
      %1084 = vmatmul.mubr.f32.gmra.mxu0 %v498
      %v1085 = vpop.f32.mrf.mxu0
      %v1086 = vadd.f32 0.0, %v1085
      %v1087 = vpop.f32.mrf.mxu0
      %1088 = vmatprep.mubr.f32.mxu0 0.0
      %1089 = vmatmul.mubr.f32.gmra.mxu0 %v499
      %v1090 = vpop.f32.mrf.mxu0
      %v1091 = vadd.f32 0.0, %v1090
      %v1092 = vpop.f32.mrf.mxu0
      %1093 = vmatprep.mubr.f32.mxu0 0.0
      %1094 = vmatmul.mubr.f32.gmra.mxu0 %v500
      %v1095 = vpop.f32.mrf.mxu0
      %v1096 = vadd.f32 0.0, %v1095
      %v1097 = vpop.f32.mrf.mxu0
      %1098 = vmatprep.mubr.f32.mxu0 0.0
      %1099 = vmatmul.mubr.f32.gmra.mxu0 %v501
      %v1100 = vpop.f32.mrf.mxu0
      %v1101 = vadd.f32 0.0, %v1100
      %v1102 = vpop.f32.mrf.mxu0
      %1103 = vmatprep.mubr.f32.mxu0 0.0
      %1104 = vmatmul.mubr.f32.gmra.mxu0 %v502
      %v1105 = vpop.f32.mrf.mxu0
      %v1106 = vadd.f32 0.0, %v1105
      %v1107 = vpop.f32.mrf.mxu0
      %1108 = vmatprep.mubr.f32.mxu0 0.0
      %1109 = vmatmul.mubr.f32.gmra.mxu0 %v503
      %v1110 = vpop.f32.mrf.mxu0
      %v1111 = vadd.f32 0.0, %v1110
      %v1112 = vpop.f32.mrf.mxu0
      %1113 = vmatprep.mubr.f32.mxu0 0.0
      %1114 = vmatmul.mubr.f32.gmra.mxu0 %v504
      %v1115 = vpop.f32.mrf.mxu0
      %v1116 = vadd.f32 0.0, %v1115
      %v1117 = vpop.f32.mrf.mxu0
      %1118 = vmatprep.mubr.f32.mxu0 0.0
      %1119 = vmatmul.mubr.f32.gmra.mxu0 %v505
      %v1120 = vpop.f32.mrf.mxu0
      %v1121 = vadd.f32 0.0, %v1120
      %v1122 = vpop.f32.mrf.mxu0
      %1123 = vmatprep.mubr.f32.mxu0 0.0
      %1124 = vmatmul.mubr.f32.gmra.mxu0 %v506
      %v1125 = vpop.f32.mrf.mxu0
      %v1126 = vadd.f32 0.0, %v1125
      %v1127 = vpop.f32.mrf.mxu0
      %1128 = vmatprep.mubr.f32.mxu0 0.0
      %1129 = vmatmul.mubr.f32.gmra.mxu0 %v507
      %v1130 = vpop.f32.mrf.mxu0
      %v1131 = vadd.f32 0.0, %v1130
      %v1132 = vpop.f32.mrf.mxu0
      %1133 = vmatprep.mubr.f32.mxu0 0.0
      %1134 = vmatmul.mubr.f32.gmra.mxu0 %v508
      %v1135 = vpop.f32.mrf.mxu0
      %v1136 = vadd.f32 0.0, %v1135
      %v1137 = vpop.f32.mrf.mxu0
      %1138 = vmatprep.mubr.f32.mxu0 0.0
      %1139 = vmatmul.mubr.f32.gmra.mxu0 %v509
      %v1140 = vpop.f32.mrf.mxu0
      %v1141 = vadd.f32 0.0, %v1140
      %v1142 = vpop.f32.mrf.mxu0
      %1143 = vmatprep.mubr.f32.mxu0 0.0
      %1144 = vmatmul.mubr.f32.gmra.mxu0 %v510
      %v1145 = vpop.f32.mrf.mxu0
      %v1146 = vadd.f32 0.0, %v1145
      %v1147 = vpop.f32.mrf.mxu0
      %1148 = vmatprep.mubr.f32.mxu0 0.0
      %1149 = vmatmul.mubr.f32.gmra.mxu0 %v511
      %v1150 = vpop.f32.mrf.mxu0
      %v1151 = vadd.f32 0.0, %v1150
      %v1152 = vpop.f32.mrf.mxu0
      %1153 = vmatprep.mubr.f32.mxu0 0.0
      %1154 = vmatmul.mubr.f32.gmra.mxu0 %v512
      %v1155 = vpop.f32.mrf.mxu0
      %v1156 = vadd.f32 0.0, %v1155
      %v1157 = vpop.f32.mrf.mxu0
      %1158 = vmatprep.mubr.f32.mxu0 0.0
      %1159 = vmatmul.mubr.f32.gmra.mxu0 %v513
      %v1160 = vpop.f32.mrf.mxu0
      %v1161 = vadd.f32 0.0, %v1160
      %v1162 = vpop.f32.mrf.mxu0
      %1163 = vmatprep.mubr.f32.mxu0 0.0
      %1164 = vmatmul.mubr.f32.gmra.mxu0 %v514
      %v1165 = vpop.f32.mrf.mxu0
      %v1166 = vadd.f32 0.0, %v1165
      %v1167 = vpop.f32.mrf.mxu0
      %1168 = vmatprep.mubr.f32.mxu0 0.0
      %1169 = vmatmul.mubr.f32.gmra.mxu0 %v515
      %v1170 = vpop.f32.mrf.mxu0
      %v1171 = vadd.f32 0.0, %v1170
      %v1172 = vpop.f32.mrf.mxu0
      %1173 = vmatprep.mubr.f32.mxu0 0.0
      %1174 = vmatmul.mubr.f32.gmra.mxu0 %v516
      %v1175 = vpop.f32.mrf.mxu0
      %v1176 = vadd.f32 0.0, %v1175
      %v1177 = vpop.f32.mrf.mxu0
      %1178 = vmatprep.mubr.f32.mxu0 0.0
      %1179 = vmatmul.mubr.f32.gmra.mxu0 %v517
      %v1180 = vpop.f32.mrf.mxu0
      %v1181 = vadd.f32 0.0, %v1180
      %v1182 = vpop.f32.mrf.mxu0
      %1183 = vmatprep.mubr.f32.mxu0 0.0
      %1184 = vmatmul.mubr.f32.gmra.mxu0 %v518
      %v1185 = vpop.f32.mrf.mxu0
      %v1186 = vadd.f32 0.0, %v1185
      %v1187 = vpop.f32.mrf.mxu0
      %1188 = vmatprep.mubr.f32.mxu0 0.0
      %1189 = vmatmul.mubr.f32.gmra.mxu0 %v519
      %v1190 = vpop.f32.mrf.mxu0
      %v1191 = vadd.f32 0.0, %v1190
      %v1192 = vpop.f32.mrf.mxu0
      %1193 = vmatprep.mubr.f32.mxu0 0.0
      %1194 = vmatmul.mubr.f32.gmra.mxu0 %v520
      %v1195 = vpop.f32.mrf.mxu0
      %v1196 = vadd.f32 0.0, %v1195
      %v1197 = vpop.f32.mrf.mxu0
      %1198 = vmatprep.mubr.f32.mxu0 0.0
      %1199 = vmatmul.mubr.f32.gmra.mxu0 %v521
      %v1200 = vpop.f32.mrf.mxu0
      %v1201 = vadd.f32 0.0, %v1200
      %v1202 = vpop.f32.mrf.mxu0
      %1203 = vmatprep.mubr.f32.mxu0 0.0
      %1204 = vmatmul.mubr.f32.gmra.mxu0 %v522
      %v1205 = vpop.f32.mrf.mxu0
      %v1206 = vadd.f32 0.0, %v1205
      %v1207 = vpop.f32.mrf.mxu0
      %1208 = vmatprep.mubr.f32.mxu0 0.0
      %1209 = vmatmul.mubr.f32.gmra.mxu0 %v523
      %v1210 = vpop.f32.mrf.mxu0
      %v1211 = vadd.f32 0.0, %v1210
      %v1212 = vpop.f32.mrf.mxu0
      %1213 = vmatprep.mubr.f32.mxu0 0.0
      %1214 = vmatmul.mubr.f32.gmra.mxu0 %v524
      %v1215 = vpop.f32.mrf.mxu0
      %v1216 = vadd.f32 0.0, %v1215
      %v1217 = vpop.f32.mrf.mxu0
      %1218 = vmatprep.mubr.f32.mxu0 0.0
      %1219 = vmatmul.mubr.f32.gmra.mxu0 %v525
      %v1220 = vpop.f32.mrf.mxu0
      %v1221 = vadd.f32 0.0, %v1220
      %v1222 = vpop.f32.mrf.mxu0
      %1223 = vmatprep.mubr.f32.mxu0 0.0
      %1224 = vmatmul.mubr.f32.gmra.mxu0 %v526
      %v1225 = vpop.f32.mrf.mxu0
      %v1226 = vadd.f32 0.0, %v1225
      %v1227 = vpop.f32.mrf.mxu0
      %1228 = vmatprep.mubr.f32.mxu0 0.0
      %1229 = vmatmul.mubr.f32.gmra.mxu0 %v527
      %v1230 = vpop.f32.mrf.mxu0
      %v1231 = vadd.f32 0.0, %v1230
      %v1232 = vpop.f32.mrf.mxu0
      %1233 = vmatprep.mubr.f32.mxu0 0.0
      %1234 = vmatmul.mubr.f32.gmra.mxu0 %v528
      %v1235 = vpop.f32.mrf.mxu0
      %v1236 = vadd.f32 0.0, %v1235
      %v1237 = vpop.f32.mrf.mxu0
      %1238 = vmatprep.mubr.f32.mxu0 0.0
      %1239 = vmatmul.mubr.f32.gmra.mxu0 %v529
      %v1240 = vpop.f32.mrf.mxu0
      %v1241 = vadd.f32 0.0, %v1240
      %v1242 = vpop.f32.mrf.mxu0
      %1243 = vmatprep.mubr.f32.mxu0 0.0
      %1244 = vmatmul.mubr.f32.gmra.mxu0 %v530
      %v1245 = vpop.f32.mrf.mxu0
      %v1246 = vadd.f32 0.0, %v1245
      %v1247 = vpop.f32.mrf.mxu0
      %1248 = vmatprep.mubr.f32.mxu0 0.0
      %1249 = vmatmul.mubr.f32.gmra.mxu0 %v531
      %v1250 = vpop.f32.mrf.mxu0
      %v1251 = vadd.f32 0.0, %v1250
      %v1252 = vpop.f32.mrf.mxu0
      %1253 = vmatprep.mubr.f32.mxu0 0.0
      %1254 = vmatmul.mubr.f32.gmra.mxu0 %v532
      %v1255 = vpop.f32.mrf.mxu0
      %v1256 = vadd.f32 0.0, %v1255
      %v1257 = vpop.f32.mrf.mxu0
      %1258 = vmatprep.mubr.f32.mxu0 0.0
      %1259 = vmatmul.mubr.f32.gmra.mxu0 %v533
      %v1260 = vpop.f32.mrf.mxu0
      %v1261 = vadd.f32 0.0, %v1260
      %v1262 = vpop.f32.mrf.mxu0
      %1263 = vmatprep.mubr.f32.mxu0 0.0
      %1264 = vmatmul.mubr.f32.gmra.mxu0 %v534
      %v1265 = vpop.f32.mrf.mxu0
      %v1266 = vadd.f32 0.0, %v1265
      %v1267 = vpop.f32.mrf.mxu0
      %1268 = vmatprep.mubr.f32.mxu0 0.0
      %1269 = vmatmul.mubr.f32.gmra.mxu0 %v535
      %v1270 = vpop.f32.mrf.mxu0
      %v1271 = vadd.f32 0.0, %v1270
      %v1272 = vpop.f32.mrf.mxu0
      %1273 = vmatprep.mubr.f32.mxu0 0.0
      %1274 = vmatmul.mubr.f32.gmra.mxu0 %v536
      %v1275 = vpop.f32.mrf.mxu0
      %v1276 = vadd.f32 0.0, %v1275
      %v1277 = vpop.f32.mrf.mxu0
      %1278 = vmatprep.mubr.f32.mxu0 0.0
      %1279 = vmatmul.mubr.f32.gmra.mxu0 %v537
      %v1280 = vpop.f32.mrf.mxu0
      %v1281 = vadd.f32 0.0, %v1280
      %v1282 = vpop.f32.mrf.mxu0
      %1283 = vmatprep.mubr.f32.mxu0 0.0
      %1284 = vmatmul.mubr.f32.gmra.mxu0 %v538
      %v1285 = vpop.f32.mrf.mxu0
      %v1286 = vadd.f32 0.0, %v1285
      %v1287 = vpop.f32.mrf.mxu0
      %1288 = vmatprep.mubr.f32.mxu0 0.0
      %1289 = vmatmul.mubr.f32.gmra.mxu0 %v539
      %v1290 = vpop.f32.mrf.mxu0
      %v1291 = vadd.f32 0.0, %v1290
      %v1292 = vpop.f32.mrf.mxu0
      %1293 = vmatprep.mubr.f32.mxu0 0.0
      %1294 = vmatmul.mubr.f32.gmra.mxu0 %v540
      %v1295 = vpop.f32.mrf.mxu0
      %v1296 = vadd.f32 0.0, %v1295
      %v1297 = vpop.f32.mrf.mxu0
      %1298 = vmatprep.mubr.f32.mxu0 0.0
      %1299 = vmatmul.mubr.f32.gmra.mxu0 %v541
      %v1300 = vpop.f32.mrf.mxu0
      %v1301 = vadd.f32 0.0, %v1300
      %v1302 = vpop.f32.mrf.mxu0
      %1303 = vmatprep.mubr.f32.mxu0 0.0
      %1304 = vmatmul.mubr.f32.gmra.mxu0 %v542
      %v1305 = vpop.f32.mrf.mxu0
      %v1306 = vadd.f32 0.0, %v1305
      %v1307 = vpop.f32.mrf.mxu0
      %1308 = vmatprep.mubr.f32.mxu0 0.0
      %1309 = vmatmul.mubr.f32.gmra.mxu0 %v543
      %v1310 = vpop.f32.mrf.mxu0
      %v1311 = vadd.f32 0.0, %v1310
      %v1312 = vpop.f32.mrf.mxu0
      %1313 = vmatprep.mubr.f32.mxu0 0.0
      %1314 = vmatmul.mubr.f32.gmra.mxu0 %v544
      %v1315 = vpop.f32.mrf.mxu0
      %v1316 = vadd.f32 0.0, %v1315
      %v1317 = vpop.f32.mrf.mxu0
      %1318 = vmatprep.mubr.f32.mxu0 0.0
      %1319 = vmatmul.mubr.f32.gmra.mxu0 %v545
      %v1320 = vpop.f32.mrf.mxu0
      %v1321 = vadd.f32 0.0, %v1320
      %v1322 = vpop.f32.mrf.mxu0
      %1323 = vmatprep.mubr.f32.mxu0 0.0
      %1324 = vmatmul.mubr.f32.gmra.mxu0 %v546
      %v1325 = vpop.f32.mrf.mxu0
      %v1326 = vadd.f32 0.0, %v1325
      %v1327 = vpop.f32.mrf.mxu0
      %1328 = vmatprep.mubr.f32.mxu0 0.0
      %1329 = vmatmul.mubr.f32.gmra.mxu0 %v547
      %v1330 = vpop.f32.mrf.mxu0
      %v1331 = vadd.f32 0.0, %v1330
      %v1332 = vpop.f32.mrf.mxu0
      %1333 = vdwg.mxu0
      %1334 = vmatprep.subr.mxu0 0.0
      %1335 = vmatpush1.msra.mxu0 %v406
      %1336 = vmatprep.subr.mxu0 0.0
      %1337 = vmatpush1.msra.mxu0 %v405
      %1338 = vmatprep.subr.mxu0 0.0
      %1339 = vmatpush1.msra.mxu0 %v404
      %1340 = vmatprep.subr.mxu0 0.0
      %1341 = vmatpush1.msra.mxu0 %v403
      %1342 = vmatprep.subr.mxu0 0.0
      %1343 = vmatpush1.msra.mxu0 %v402
      %1344 = vmatprep.subr.mxu0 0.0
      %1345 = vmatpush1.msra.mxu0 %v401
      %1346 = vmatprep.subr.mxu0 0.0
      %1347 = vmatpush1.msra.mxu0 %v400
      %1348 = vmatprep.subr.mxu0 0.0
      %1349 = vmatpush1.msra.mxu0 %v399
      %1350 = vmatprep.subr.mxu0 0.0
      %1351 = vmatpush1.msra.mxu0 %v398
      %1352 = vmatprep.subr.mxu0 0.0
      %1353 = vmatpush1.msra.mxu0 %v397
      %1354 = vmatprep.subr.mxu0 0.0
      %1355 = vmatpush1.msra.mxu0 %v396
      %1356 = vmatprep.subr.mxu0 0.0
      %1357 = vmatpush1.msra.mxu0 %v395
      %1358 = vmatprep.subr.mxu0 0.0
      %1359 = vmatpush1.msra.mxu0 %v394
      %1360 = vmatprep.subr.mxu0 0.0
      %1361 = vmatpush1.msra.mxu0 %v393
      %1362 = vmatprep.subr.mxu0 0.0
      %1363 = vmatpush1.msra.mxu0 %v392
      %1364 = vmatprep.subr.mxu0 0.0
      %1365 = vmatpush1.msra.mxu0 %v391
      %1366 = vmatprep.subr.mxu0 0.0
      %1367 = vmatpush2.msra.mxu0 0.0
      %1368 = vmatprep.subr.mxu0 0.0
      %1369 = vmatpush2.msra.mxu0 0.0
      %1370 = vmatprep.subr.mxu0 0.0
      %1371 = vmatpush2.msra.mxu0 0.0
      %1372 = vmatprep.subr.mxu0 0.0
      %1373 = vmatpush2.msra.mxu0 0.0
      %1374 = vmatprep.subr.mxu0 0.0
      %1375 = vmatpush2.msra.mxu0 0.0
      %1376 = vmatprep.subr.mxu0 0.0
      %1377 = vmatpush2.msra.mxu0 0.0
      %1378 = vmatprep.subr.mxu0 0.0
      %1379 = vmatpush2.msra.mxu0 0.0
      %1380 = vmatprep.subr.mxu0 0.0
      %1381 = vmatpush2.msra.mxu0 0.0
      %1382 = vmatprep.subr.mxu0 0.0
      %1383 = vmatpush2.msra.mxu0 0.0
      %1384 = vmatprep.subr.mxu0 0.0
      %1385 = vmatpush2.msra.mxu0 0.0
      %1386 = vmatprep.subr.mxu0 0.0
      %1387 = vmatpush2.msra.mxu0 0.0
      %1388 = vmatprep.subr.mxu0 0.0
      %1389 = vmatpush2.msra.mxu0 0.0
      %1390 = vmatprep.subr.mxu0 0.0
      %1391 = vmatpush2.msra.mxu0 0.0
      %1392 = vmatprep.subr.mxu0 0.0
      %1393 = vmatpush2.msra.mxu0 0.0
      %1394 = vmatprep.subr.mxu0 0.0
      %1395 = vmatpush2.msra.mxu0 0.0
      %1396 = vmatprep.subr.mxu0 0.0
      %1397 = vmatpush2.msra.mxu0 0.0
      %1398 = vmatprep.mubr.f32.mxu0 0.0
      %1399 = vmatmul.mubr.f32.gmra.mxu0 %v250
      %v1400 = vpop.f32.mrf.mxu0
      %v1401 = vadd.f32 %v631, %v1400
      %v1402 = vpop.f32.mrf.mxu0
      %1403 = vmatprep.mubr.f32.mxu0 0.0
      %1404 = vmatmul.mubr.f32.gmra.mxu0 %v251
      %v1405 = vpop.f32.mrf.mxu0
      %v1406 = vadd.f32 %v636, %v1405
      %v1407 = vpop.f32.mrf.mxu0
      %1408 = vmatprep.mubr.f32.mxu0 0.0
      %1409 = vmatmul.mubr.f32.gmra.mxu0 %v252
      %v1410 = vpop.f32.mrf.mxu0
      %v1411 = vadd.f32 %v641, %v1410
      %v1412 = vpop.f32.mrf.mxu0
      %1413 = vmatprep.mubr.f32.mxu0 0.0
      %1414 = vmatmul.mubr.f32.gmra.mxu0 %v253
      %v1415 = vpop.f32.mrf.mxu0
      %v1416 = vadd.f32 %v646, %v1415
      %v1417 = vpop.f32.mrf.mxu0
      %1418 = vmatprep.mubr.f32.mxu0 0.0
      %1419 = vmatmul.mubr.f32.gmra.mxu0 %v254
      %v1420 = vpop.f32.mrf.mxu0
      %v1421 = vadd.f32 %v651, %v1420
      %v1422 = vpop.f32.mrf.mxu0
      %1423 = vmatprep.mubr.f32.mxu0 0.0
      %1424 = vmatmul.mubr.f32.gmra.mxu0 %v255
      %v1425 = vpop.f32.mrf.mxu0
      %v1426 = vadd.f32 %v656, %v1425
      %v1427 = vpop.f32.mrf.mxu0
      %1428 = vmatprep.mubr.f32.mxu0 0.0
      %1429 = vmatmul.mubr.f32.gmra.mxu0 %v256
      %v1430 = vpop.f32.mrf.mxu0
      %v1431 = vadd.f32 %v661, %v1430
      %v1432 = vpop.f32.mrf.mxu0
      %1433 = vmatprep.mubr.f32.mxu0 0.0
      %1434 = vmatmul.mubr.f32.gmra.mxu0 %v257
      %v1435 = vpop.f32.mrf.mxu0
      %v1436 = vadd.f32 %v666, %v1435
      %v1437 = vpop.f32.mrf.mxu0
      %1438 = vmatprep.mubr.f32.mxu0 0.0
      %1439 = vmatmul.mubr.f32.gmra.mxu0 %v258
      %v1440 = vpop.f32.mrf.mxu0
      %v1441 = vadd.f32 %v671, %v1440
      %v1442 = vpop.f32.mrf.mxu0
      %1443 = vmatprep.mubr.f32.mxu0 0.0
      %1444 = vmatmul.mubr.f32.gmra.mxu0 %v259
      %v1445 = vpop.f32.mrf.mxu0
      %v1446 = vadd.f32 %v676, %v1445
      %v1447 = vpop.f32.mrf.mxu0
      %1448 = vmatprep.mubr.f32.mxu0 0.0
      %1449 = vmatmul.mubr.f32.gmra.mxu0 %v260
      %v1450 = vpop.f32.mrf.mxu0
      %v1451 = vadd.f32 %v681, %v1450
      %v1452 = vpop.f32.mrf.mxu0
      %1453 = vmatprep.mubr.f32.mxu0 0.0
      %1454 = vmatmul.mubr.f32.gmra.mxu0 %v261
      %v1455 = vpop.f32.mrf.mxu0
      %v1456 = vadd.f32 %v686, %v1455
      %v1457 = vpop.f32.mrf.mxu0
      %1458 = vmatprep.mubr.f32.mxu0 0.0
      %1459 = vmatmul.mubr.f32.gmra.mxu0 %v262
      %v1460 = vpop.f32.mrf.mxu0
      %v1461 = vadd.f32 %v691, %v1460
      %v1462 = vpop.f32.mrf.mxu0
      %1463 = vmatprep.mubr.f32.mxu0 0.0
      %1464 = vmatmul.mubr.f32.gmra.mxu0 %v263
      %v1465 = vpop.f32.mrf.mxu0
      %v1466 = vadd.f32 %v696, %v1465
      %v1467 = vpop.f32.mrf.mxu0
      %1468 = vmatprep.mubr.f32.mxu0 0.0
      %1469 = vmatmul.mubr.f32.gmra.mxu0 %v264
      %v1470 = vpop.f32.mrf.mxu0
      %v1471 = vadd.f32 %v701, %v1470
      %v1472 = vpop.f32.mrf.mxu0
      %1473 = vmatprep.mubr.f32.mxu0 0.0
      %1474 = vmatmul.mubr.f32.gmra.mxu0 %v265
      %v1475 = vpop.f32.mrf.mxu0
      %v1476 = vadd.f32 %v706, %v1475
      %v1477 = vpop.f32.mrf.mxu0
      %1478 = vmatprep.mubr.f32.mxu0 0.0
      %1479 = vmatmul.mubr.f32.gmra.mxu0 %v266
      %v1480 = vpop.f32.mrf.mxu0
      %v1481 = vadd.f32 %v711, %v1480
      %v1482 = vpop.f32.mrf.mxu0
      %1483 = vmatprep.mubr.f32.mxu0 0.0
      %1484 = vmatmul.mubr.f32.gmra.mxu0 %v267
      %v1485 = vpop.f32.mrf.mxu0
      %v1486 = vadd.f32 %v716, %v1485
      %v1487 = vpop.f32.mrf.mxu0
      %1488 = vmatprep.mubr.f32.mxu0 0.0
      %1489 = vmatmul.mubr.f32.gmra.mxu0 %v268
      %v1490 = vpop.f32.mrf.mxu0
      %v1491 = vadd.f32 %v721, %v1490
      %v1492 = vpop.f32.mrf.mxu0
      %1493 = vmatprep.mubr.f32.mxu0 0.0
      %1494 = vmatmul.mubr.f32.gmra.mxu0 %v269
      %v1495 = vpop.f32.mrf.mxu0
      %v1496 = vadd.f32 %v726, %v1495
      %v1497 = vpop.f32.mrf.mxu0
      %1498 = vmatprep.mubr.f32.mxu0 0.0
      %1499 = vmatmul.mubr.f32.gmra.mxu0 %v270
      %v1500 = vpop.f32.mrf.mxu0
      %v1501 = vadd.f32 %v731, %v1500
      %v1502 = vpop.f32.mrf.mxu0
      %1503 = vmatprep.mubr.f32.mxu0 0.0
      %1504 = vmatmul.mubr.f32.gmra.mxu0 %v271
      %v1505 = vpop.f32.mrf.mxu0
      %v1506 = vadd.f32 %v736, %v1505
      %v1507 = vpop.f32.mrf.mxu0
      %1508 = vmatprep.mubr.f32.mxu0 0.0
      %1509 = vmatmul.mubr.f32.gmra.mxu0 %v272
      %v1510 = vpop.f32.mrf.mxu0
      %v1511 = vadd.f32 %v741, %v1510
      %v1512 = vpop.f32.mrf.mxu0
      %1513 = vmatprep.mubr.f32.mxu0 0.0
      %1514 = vmatmul.mubr.f32.gmra.mxu0 %v273
      %v1515 = vpop.f32.mrf.mxu0
      %v1516 = vadd.f32 %v746, %v1515
      %v1517 = vpop.f32.mrf.mxu0
      %1518 = vmatprep.mubr.f32.mxu0 0.0
      %1519 = vmatmul.mubr.f32.gmra.mxu0 %v274
      %v1520 = vpop.f32.mrf.mxu0
      %v1521 = vadd.f32 %v751, %v1520
      %v1522 = vpop.f32.mrf.mxu0
      %1523 = vmatprep.mubr.f32.mxu0 0.0
      %1524 = vmatmul.mubr.f32.gmra.mxu0 %v275
      %v1525 = vpop.f32.mrf.mxu0
      %v1526 = vadd.f32 %v756, %v1525
      %v1527 = vpop.f32.mrf.mxu0
      %1528 = vmatprep.mubr.f32.mxu0 0.0
      %1529 = vmatmul.mubr.f32.gmra.mxu0 %v276
      %v1530 = vpop.f32.mrf.mxu0
      %v1531 = vadd.f32 %v761, %v1530
      %v1532 = vpop.f32.mrf.mxu0
      %1533 = vmatprep.mubr.f32.mxu0 0.0
      %1534 = vmatmul.mubr.f32.gmra.mxu0 %v277
      %v1535 = vpop.f32.mrf.mxu0
      %v1536 = vadd.f32 %v766, %v1535
      %v1537 = vpop.f32.mrf.mxu0
      %1538 = vmatprep.mubr.f32.mxu0 0.0
      %1539 = vmatmul.mubr.f32.gmra.mxu0 %v278
      %v1540 = vpop.f32.mrf.mxu0
      %v1541 = vadd.f32 %v771, %v1540
      %v1542 = vpop.f32.mrf.mxu0
      %1543 = vmatprep.mubr.f32.mxu0 0.0
      %1544 = vmatmul.mubr.f32.gmra.mxu0 %v279
      %v1545 = vpop.f32.mrf.mxu0
      %v1546 = vadd.f32 %v776, %v1545
      %v1547 = vpop.f32.mrf.mxu0
      %1548 = vmatprep.mubr.f32.mxu0 0.0
      %1549 = vmatmul.mubr.f32.gmra.mxu0 %v280
      %v1550 = vpop.f32.mrf.mxu0
      %v1551 = vadd.f32 %v781, %v1550
      %v1552 = vpop.f32.mrf.mxu0
      %1553 = vmatprep.mubr.f32.mxu0 0.0
      %1554 = vmatmul.mubr.f32.gmra.mxu0 %v281
      %v1555 = vpop.f32.mrf.mxu0
      %v1556 = vadd.f32 %v786, %v1555
      %v1557 = vpop.f32.mrf.mxu0
      %1558 = vmatprep.mubr.f32.mxu0 0.0
      %1559 = vmatmul.mubr.f32.gmra.mxu0 %v282
      %v1560 = vpop.f32.mrf.mxu0
      %v1561 = vadd.f32 %v791, %v1560
      %v1562 = vpop.f32.mrf.mxu0
      %1563 = vmatprep.mubr.f32.mxu0 0.0
      %1564 = vmatmul.mubr.f32.gmra.mxu0 %v283
      %v1565 = vpop.f32.mrf.mxu0
      %v1566 = vadd.f32 %v796, %v1565
      %v1567 = vpop.f32.mrf.mxu0
      %1568 = vmatprep.mubr.f32.mxu0 0.0
      %1569 = vmatmul.mubr.f32.gmra.mxu0 %v284
      %v1570 = vpop.f32.mrf.mxu0
      %v1571 = vadd.f32 %v801, %v1570
      %v1572 = vpop.f32.mrf.mxu0
      %1573 = vmatprep.mubr.f32.mxu0 0.0
      %1574 = vmatmul.mubr.f32.gmra.mxu0 %v285
      %v1575 = vpop.f32.mrf.mxu0
      %v1576 = vadd.f32 %v806, %v1575
      %v1577 = vpop.f32.mrf.mxu0
      %1578 = vmatprep.mubr.f32.mxu0 0.0
      %1579 = vmatmul.mubr.f32.gmra.mxu0 %v286
      %v1580 = vpop.f32.mrf.mxu0
      %v1581 = vadd.f32 %v811, %v1580
      %v1582 = vpop.f32.mrf.mxu0
      %1583 = vmatprep.mubr.f32.mxu0 0.0
      %1584 = vmatmul.mubr.f32.gmra.mxu0 %v287
      %v1585 = vpop.f32.mrf.mxu0
      %v1586 = vadd.f32 %v816, %v1585
      %v1587 = vpop.f32.mrf.mxu0
      %1588 = vmatprep.mubr.f32.mxu0 0.0
      %1589 = vmatmul.mubr.f32.gmra.mxu0 %v288
      %v1590 = vpop.f32.mrf.mxu0
      %v1591 = vadd.f32 %v821, %v1590
      %v1592 = vpop.f32.mrf.mxu0
      %1593 = vmatprep.mubr.f32.mxu0 0.0
      %1594 = vmatmul.mubr.f32.gmra.mxu0 %v289
      %v1595 = vpop.f32.mrf.mxu0
      %v1596 = vadd.f32 %v826, %v1595
      %v1597 = vpop.f32.mrf.mxu0
      %1598 = vmatprep.mubr.f32.mxu0 0.0
      %1599 = vmatmul.mubr.f32.gmra.mxu0 %v290
      %v1600 = vpop.f32.mrf.mxu0
      %v1601 = vadd.f32 %v831, %v1600
      %v1602 = vpop.f32.mrf.mxu0
      %1603 = vmatprep.mubr.f32.mxu0 0.0
      %1604 = vmatmul.mubr.f32.gmra.mxu0 %v291
      %v1605 = vpop.f32.mrf.mxu0
      %v1606 = vadd.f32 %v836, %v1605
      %v1607 = vpop.f32.mrf.mxu0
      %1608 = vmatprep.mubr.f32.mxu0 0.0
      %1609 = vmatmul.mubr.f32.gmra.mxu0 %v292
      %v1610 = vpop.f32.mrf.mxu0
      %v1611 = vadd.f32 %v841, %v1610
      %v1612 = vpop.f32.mrf.mxu0
      %1613 = vmatprep.mubr.f32.mxu0 0.0
      %1614 = vmatmul.mubr.f32.gmra.mxu0 %v293
      %v1615 = vpop.f32.mrf.mxu0
      %v1616 = vadd.f32 %v846, %v1615
      %v1617 = vpop.f32.mrf.mxu0
      %1618 = vmatprep.mubr.f32.mxu0 0.0
      %1619 = vmatmul.mubr.f32.gmra.mxu0 %v294
      %v1620 = vpop.f32.mrf.mxu0
      %v1621 = vadd.f32 %v851, %v1620
      %v1622 = vpop.f32.mrf.mxu0
      %1623 = vmatprep.mubr.f32.mxu0 0.0
      %1624 = vmatmul.mubr.f32.gmra.mxu0 %v295
      %v1625 = vpop.f32.mrf.mxu0
      %v1626 = vadd.f32 %v856, %v1625
      %v1627 = vpop.f32.mrf.mxu0
      %1628 = vmatprep.mubr.f32.mxu0 0.0
      %1629 = vmatmul.mubr.f32.gmra.mxu0 %v296
      %v1630 = vpop.f32.mrf.mxu0
      %v1631 = vadd.f32 %v861, %v1630
      %v1632 = vpop.f32.mrf.mxu0
      %1633 = vmatprep.mubr.f32.mxu0 0.0
      %1634 = vmatmul.mubr.f32.gmra.mxu0 %v297
      %v1635 = vpop.f32.mrf.mxu0
      %v1636 = vadd.f32 %v866, %v1635
      %v1637 = vpop.f32.mrf.mxu0
      %1638 = vmatprep.mubr.f32.mxu0 0.0
      %1639 = vmatmul.mubr.f32.gmra.mxu0 %v298
      %v1640 = vpop.f32.mrf.mxu0
      %v1641 = vadd.f32 %v871, %v1640
      %v1642 = vpop.f32.mrf.mxu0
      %1643 = vmatprep.mubr.f32.mxu0 0.0
      %1644 = vmatmul.mubr.f32.gmra.mxu0 %v299
      %v1645 = vpop.f32.mrf.mxu0
      %v1646 = vadd.f32 %v876, %v1645
      %v1647 = vpop.f32.mrf.mxu0
      %1648 = vmatprep.mubr.f32.mxu0 0.0
      %1649 = vmatmul.mubr.f32.gmra.mxu0 %v300
      %v1650 = vpop.f32.mrf.mxu0
      %v1651 = vadd.f32 %v881, %v1650
      %v1652 = vpop.f32.mrf.mxu0
      %1653 = vmatprep.mubr.f32.mxu0 0.0
      %1654 = vmatmul.mubr.f32.gmra.mxu0 %v301
      %v1655 = vpop.f32.mrf.mxu0
      %v1656 = vadd.f32 %v886, %v1655
      %v1657 = vpop.f32.mrf.mxu0
      %1658 = vmatprep.mubr.f32.mxu0 0.0
      %1659 = vmatmul.mubr.f32.gmra.mxu0 %v302
      %v1660 = vpop.f32.mrf.mxu0
      %v1661 = vadd.f32 %v891, %v1660
      %v1662 = vpop.f32.mrf.mxu0
      %1663 = vmatprep.mubr.f32.mxu0 0.0
      %1664 = vmatmul.mubr.f32.gmra.mxu0 %v303
      %v1665 = vpop.f32.mrf.mxu0
      %v1666 = vadd.f32 %v896, %v1665
      %v1667 = vpop.f32.mrf.mxu0
      %1668 = vmatprep.mubr.f32.mxu0 0.0
      %1669 = vmatmul.mubr.f32.gmra.mxu0 %v304
      %v1670 = vpop.f32.mrf.mxu0
      %v1671 = vadd.f32 %v901, %v1670
      %v1672 = vpop.f32.mrf.mxu0
      %1673 = vmatprep.mubr.f32.mxu0 0.0
      %1674 = vmatmul.mubr.f32.gmra.mxu0 %v305
      %v1675 = vpop.f32.mrf.mxu0
      %v1676 = vadd.f32 %v906, %v1675
      %v1677 = vpop.f32.mrf.mxu0
      %1678 = vmatprep.mubr.f32.mxu0 0.0
      %1679 = vmatmul.mubr.f32.gmra.mxu0 %v306
      %v1680 = vpop.f32.mrf.mxu0
      %v1681 = vadd.f32 %v911, %v1680
      %v1682 = vpop.f32.mrf.mxu0
      %1683 = vmatprep.mubr.f32.mxu0 0.0
      %1684 = vmatmul.mubr.f32.gmra.mxu0 %v307
      %v1685 = vpop.f32.mrf.mxu0
      %v1686 = vadd.f32 %v916, %v1685
      %v1687 = vpop.f32.mrf.mxu0
      %1688 = vmatprep.mubr.f32.mxu0 0.0
      %1689 = vmatmul.mubr.f32.gmra.mxu0 %v308
      %v1690 = vpop.f32.mrf.mxu0
      %v1691 = vadd.f32 %v921, %v1690
      %v1692 = vpop.f32.mrf.mxu0
      %1693 = vmatprep.mubr.f32.mxu0 0.0
      %1694 = vmatmul.mubr.f32.gmra.mxu0 %v309
      %v1695 = vpop.f32.mrf.mxu0
      %v1696 = vadd.f32 %v926, %v1695
      %v1697 = vpop.f32.mrf.mxu0
      %1698 = vmatprep.mubr.f32.mxu0 0.0
      %1699 = vmatmul.mubr.f32.gmra.mxu0 %v310
      %v1700 = vpop.f32.mrf.mxu0
      %v1701 = vadd.f32 %v931, %v1700
      %v1702 = vpop.f32.mrf.mxu0
      %1703 = vmatprep.mubr.f32.mxu0 0.0
      %1704 = vmatmul.mubr.f32.gmra.mxu0 %v311
      %v1705 = vpop.f32.mrf.mxu0
      %v1706 = vadd.f32 %v936, %v1705
      %v1707 = vpop.f32.mrf.mxu0
      %1708 = vmatprep.mubr.f32.mxu0 0.0
      %1709 = vmatmul.mubr.f32.gmra.mxu0 %v312
      %v1710 = vpop.f32.mrf.mxu0
      %v1711 = vadd.f32 %v941, %v1710
      %v1712 = vpop.f32.mrf.mxu0
      %1713 = vmatprep.mubr.f32.mxu0 0.0
      %1714 = vmatmul.mubr.f32.gmra.mxu0 %v313
      %v1715 = vpop.f32.mrf.mxu0
      %v1716 = vadd.f32 %v946, %v1715
      %v1717 = vpop.f32.mrf.mxu0
      %1718 = vmatprep.mubr.f32.mxu0 0.0
      %1719 = vmatmul.mubr.f32.gmra.mxu0 %v314
      %v1720 = vpop.f32.mrf.mxu0
      %v1721 = vadd.f32 %v951, %v1720
      %v1722 = vpop.f32.mrf.mxu0
      %1723 = vmatprep.mubr.f32.mxu0 0.0
      %1724 = vmatmul.mubr.f32.gmra.mxu0 %v315
      %v1725 = vpop.f32.mrf.mxu0
      %v1726 = vadd.f32 %v956, %v1725
      %v1727 = vpop.f32.mrf.mxu0
      %1728 = vmatprep.mubr.f32.mxu0 0.0
      %1729 = vmatmul.mubr.f32.gmra.mxu0 %v316
      %v1730 = vpop.f32.mrf.mxu0
      %v1731 = vadd.f32 %v961, %v1730
      %v1732 = vpop.f32.mrf.mxu0
      %1733 = vmatprep.mubr.f32.mxu0 0.0
      %1734 = vmatmul.mubr.f32.gmra.mxu0 %v317
      %v1735 = vpop.f32.mrf.mxu0
      %v1736 = vadd.f32 %v966, %v1735
      %v1737 = vpop.f32.mrf.mxu0
      %1738 = vmatprep.mubr.f32.mxu0 0.0
      %1739 = vmatmul.mubr.f32.gmra.mxu0 %v318
      %v1740 = vpop.f32.mrf.mxu0
      %v1741 = vadd.f32 %v971, %v1740
      %v1742 = vpop.f32.mrf.mxu0
      %1743 = vmatprep.mubr.f32.mxu0 0.0
      %1744 = vmatmul.mubr.f32.gmra.mxu0 %v319
      %v1745 = vpop.f32.mrf.mxu0
      %v1746 = vadd.f32 %v976, %v1745
      %v1747 = vpop.f32.mrf.mxu0
      %1748 = vmatprep.mubr.f32.mxu0 0.0
      %1749 = vmatmul.mubr.f32.gmra.mxu0 %v320
      %v1750 = vpop.f32.mrf.mxu0
      %v1751 = vadd.f32 %v981, %v1750
      %v1752 = vpop.f32.mrf.mxu0
      %1753 = vmatprep.mubr.f32.mxu0 0.0
      %1754 = vmatmul.mubr.f32.gmra.mxu0 %v321
      %v1755 = vpop.f32.mrf.mxu0
      %v1756 = vadd.f32 %v986, %v1755
      %v1757 = vpop.f32.mrf.mxu0
      %1758 = vmatprep.mubr.f32.mxu0 0.0
      %1759 = vmatmul.mubr.f32.gmra.mxu0 %v322
      %v1760 = vpop.f32.mrf.mxu0
      %v1761 = vadd.f32 %v991, %v1760
      %v1762 = vpop.f32.mrf.mxu0
      %1763 = vmatprep.mubr.f32.mxu0 0.0
      %1764 = vmatmul.mubr.f32.gmra.mxu0 %v323
      %v1765 = vpop.f32.mrf.mxu0
      %v1766 = vadd.f32 %v996, %v1765
      %v1767 = vpop.f32.mrf.mxu0
      %1768 = vmatprep.mubr.f32.mxu0 0.0
      %1769 = vmatmul.mubr.f32.gmra.mxu0 %v324
      %v1770 = vpop.f32.mrf.mxu0
      %v1771 = vadd.f32 %v1001, %v1770
      %v1772 = vpop.f32.mrf.mxu0
      %1773 = vmatprep.mubr.f32.mxu0 0.0
      %1774 = vmatmul.mubr.f32.gmra.mxu0 %v325
      %v1775 = vpop.f32.mrf.mxu0
      %v1776 = vadd.f32 %v1006, %v1775
      %v1777 = vpop.f32.mrf.mxu0
      %1778 = vmatprep.mubr.f32.mxu0 0.0
      %1779 = vmatmul.mubr.f32.gmra.mxu0 %v326
      %v1780 = vpop.f32.mrf.mxu0
      %v1781 = vadd.f32 %v1011, %v1780
      %v1782 = vpop.f32.mrf.mxu0
      %1783 = vmatprep.mubr.f32.mxu0 0.0
      %1784 = vmatmul.mubr.f32.gmra.mxu0 %v327
      %v1785 = vpop.f32.mrf.mxu0
      %v1786 = vadd.f32 %v1016, %v1785
      %v1787 = vpop.f32.mrf.mxu0
      %1788 = vmatprep.mubr.f32.mxu0 0.0
      %1789 = vmatmul.mubr.f32.gmra.mxu0 %v328
      %v1790 = vpop.f32.mrf.mxu0
      %v1791 = vadd.f32 %v1021, %v1790
      %v1792 = vpop.f32.mrf.mxu0
      %1793 = vmatprep.mubr.f32.mxu0 0.0
      %1794 = vmatmul.mubr.f32.gmra.mxu0 %v329
      %v1795 = vpop.f32.mrf.mxu0
      %v1796 = vadd.f32 %v1026, %v1795
      %v1797 = vpop.f32.mrf.mxu0
      %1798 = vmatprep.mubr.f32.mxu0 0.0
      %1799 = vmatmul.mubr.f32.gmra.mxu0 %v330
      %v1800 = vpop.f32.mrf.mxu0
      %v1801 = vadd.f32 %v1031, %v1800
      %v1802 = vpop.f32.mrf.mxu0
      %1803 = vmatprep.mubr.f32.mxu0 0.0
      %1804 = vmatmul.mubr.f32.gmra.mxu0 %v331
      %v1805 = vpop.f32.mrf.mxu0
      %v1806 = vadd.f32 %v1036, %v1805
      %v1807 = vpop.f32.mrf.mxu0
      %1808 = vmatprep.mubr.f32.mxu0 0.0
      %1809 = vmatmul.mubr.f32.gmra.mxu0 %v332
      %v1810 = vpop.f32.mrf.mxu0
      %v1811 = vadd.f32 %v1041, %v1810
      %v1812 = vpop.f32.mrf.mxu0
      %1813 = vmatprep.mubr.f32.mxu0 0.0
      %1814 = vmatmul.mubr.f32.gmra.mxu0 %v333
      %v1815 = vpop.f32.mrf.mxu0
      %v1816 = vadd.f32 %v1046, %v1815
      %v1817 = vpop.f32.mrf.mxu0
      %1818 = vmatprep.mubr.f32.mxu0 0.0
      %1819 = vmatmul.mubr.f32.gmra.mxu0 %v334
      %v1820 = vpop.f32.mrf.mxu0
      %v1821 = vadd.f32 %v1051, %v1820
      %v1822 = vpop.f32.mrf.mxu0
      %1823 = vmatprep.mubr.f32.mxu0 0.0
      %1824 = vmatmul.mubr.f32.gmra.mxu0 %v335
      %v1825 = vpop.f32.mrf.mxu0
      %v1826 = vadd.f32 %v1056, %v1825
      %v1827 = vpop.f32.mrf.mxu0
      %1828 = vmatprep.mubr.f32.mxu0 0.0
      %1829 = vmatmul.mubr.f32.gmra.mxu0 %v336
      %v1830 = vpop.f32.mrf.mxu0
      %v1831 = vadd.f32 %v1061, %v1830
      %v1832 = vpop.f32.mrf.mxu0
      %1833 = vmatprep.mubr.f32.mxu0 0.0
      %1834 = vmatmul.mubr.f32.gmra.mxu0 %v337
      %v1835 = vpop.f32.mrf.mxu0
      %v1836 = vadd.f32 %v1066, %v1835
      %v1837 = vpop.f32.mrf.mxu0
      %1838 = vmatprep.mubr.f32.mxu0 0.0
      %1839 = vmatmul.mubr.f32.gmra.mxu0 %v338
      %v1840 = vpop.f32.mrf.mxu0
      %v1841 = vadd.f32 %v1071, %v1840
      %v1842 = vpop.f32.mrf.mxu0
      %1843 = vmatprep.mubr.f32.mxu0 0.0
      %1844 = vmatmul.mubr.f32.gmra.mxu0 %v339
      %v1845 = vpop.f32.mrf.mxu0
      %v1846 = vadd.f32 %v1076, %v1845
      %v1847 = vpop.f32.mrf.mxu0
      %1848 = vmatprep.mubr.f32.mxu0 0.0
      %1849 = vmatmul.mubr.f32.gmra.mxu0 %v340
      %v1850 = vpop.f32.mrf.mxu0
      %v1851 = vadd.f32 %v1081, %v1850
      %v1852 = vpop.f32.mrf.mxu0
      %1853 = vmatprep.mubr.f32.mxu0 0.0
      %1854 = vmatmul.mubr.f32.gmra.mxu0 %v341
      %v1855 = vpop.f32.mrf.mxu0
      %v1856 = vadd.f32 %v1086, %v1855
      %v1857 = vpop.f32.mrf.mxu0
      %1858 = vmatprep.mubr.f32.mxu0 0.0
      %1859 = vmatmul.mubr.f32.gmra.mxu0 %v342
      %v1860 = vpop.f32.mrf.mxu0
      %v1861 = vadd.f32 %v1091, %v1860
      %v1862 = vpop.f32.mrf.mxu0
      %1863 = vmatprep.mubr.f32.mxu0 0.0
      %1864 = vmatmul.mubr.f32.gmra.mxu0 %v343
      %v1865 = vpop.f32.mrf.mxu0
      %v1866 = vadd.f32 %v1096, %v1865
      %v1867 = vpop.f32.mrf.mxu0
      %1868 = vmatprep.mubr.f32.mxu0 0.0
      %1869 = vmatmul.mubr.f32.gmra.mxu0 %v344
      %v1870 = vpop.f32.mrf.mxu0
      %v1871 = vadd.f32 %v1101, %v1870
      %v1872 = vpop.f32.mrf.mxu0
      %1873 = vmatprep.mubr.f32.mxu0 0.0
      %1874 = vmatmul.mubr.f32.gmra.mxu0 %v345
      %v1875 = vpop.f32.mrf.mxu0
      %v1876 = vadd.f32 %v1106, %v1875
      %v1877 = vpop.f32.mrf.mxu0
      %1878 = vmatprep.mubr.f32.mxu0 0.0
      %1879 = vmatmul.mubr.f32.gmra.mxu0 %v346
      %v1880 = vpop.f32.mrf.mxu0
      %v1881 = vadd.f32 %v1111, %v1880
      %v1882 = vpop.f32.mrf.mxu0
      %1883 = vmatprep.mubr.f32.mxu0 0.0
      %1884 = vmatmul.mubr.f32.gmra.mxu0 %v347
      %v1885 = vpop.f32.mrf.mxu0
      %v1886 = vadd.f32 %v1116, %v1885
      %v1887 = vpop.f32.mrf.mxu0
      %1888 = vmatprep.mubr.f32.mxu0 0.0
      %1889 = vmatmul.mubr.f32.gmra.mxu0 %v348
      %v1890 = vpop.f32.mrf.mxu0
      %v1891 = vadd.f32 %v1121, %v1890
      %v1892 = vpop.f32.mrf.mxu0
      %1893 = vmatprep.mubr.f32.mxu0 0.0
      %1894 = vmatmul.mubr.f32.gmra.mxu0 %v349
      %v1895 = vpop.f32.mrf.mxu0
      %v1896 = vadd.f32 %v1126, %v1895
      %v1897 = vpop.f32.mrf.mxu0
      %1898 = vmatprep.mubr.f32.mxu0 0.0
      %1899 = vmatmul.mubr.f32.gmra.mxu0 %v350
      %v1900 = vpop.f32.mrf.mxu0
      %v1901 = vadd.f32 %v1131, %v1900
      %v1902 = vpop.f32.mrf.mxu0
      %1903 = vmatprep.mubr.f32.mxu0 0.0
      %1904 = vmatmul.mubr.f32.gmra.mxu0 %v351
      %v1905 = vpop.f32.mrf.mxu0
      %v1906 = vadd.f32 %v1136, %v1905
      %v1907 = vpop.f32.mrf.mxu0
      %1908 = vmatprep.mubr.f32.mxu0 0.0
      %1909 = vmatmul.mubr.f32.gmra.mxu0 %v352
      %v1910 = vpop.f32.mrf.mxu0
      %v1911 = vadd.f32 %v1141, %v1910
      %v1912 = vpop.f32.mrf.mxu0
      %1913 = vmatprep.mubr.f32.mxu0 0.0
      %1914 = vmatmul.mubr.f32.gmra.mxu0 %v353
      %v1915 = vpop.f32.mrf.mxu0
      %v1916 = vadd.f32 %v1146, %v1915
      %v1917 = vpop.f32.mrf.mxu0
      %1918 = vmatprep.mubr.f32.mxu0 0.0
      %1919 = vmatmul.mubr.f32.gmra.mxu0 %v354
      %v1920 = vpop.f32.mrf.mxu0
      %v1921 = vadd.f32 %v1151, %v1920
      %v1922 = vpop.f32.mrf.mxu0
      %1923 = vmatprep.mubr.f32.mxu0 0.0
      %1924 = vmatmul.mubr.f32.gmra.mxu0 %v355
      %v1925 = vpop.f32.mrf.mxu0
      %v1926 = vadd.f32 %v1156, %v1925
      %v1927 = vpop.f32.mrf.mxu0
      %1928 = vmatprep.mubr.f32.mxu0 0.0
      %1929 = vmatmul.mubr.f32.gmra.mxu0 %v356
      %v1930 = vpop.f32.mrf.mxu0
      %v1931 = vadd.f32 %v1161, %v1930
      %v1932 = vpop.f32.mrf.mxu0
      %1933 = vmatprep.mubr.f32.mxu0 0.0
      %1934 = vmatmul.mubr.f32.gmra.mxu0 %v357
      %v1935 = vpop.f32.mrf.mxu0
      %v1936 = vadd.f32 %v1166, %v1935
      %v1937 = vpop.f32.mrf.mxu0
      %1938 = vmatprep.mubr.f32.mxu0 0.0
      %1939 = vmatmul.mubr.f32.gmra.mxu0 %v358
      %v1940 = vpop.f32.mrf.mxu0
      %v1941 = vadd.f32 %v1171, %v1940
      %v1942 = vpop.f32.mrf.mxu0
      %1943 = vmatprep.mubr.f32.mxu0 0.0
      %1944 = vmatmul.mubr.f32.gmra.mxu0 %v359
      %v1945 = vpop.f32.mrf.mxu0
      %v1946 = vadd.f32 %v1176, %v1945
      %v1947 = vpop.f32.mrf.mxu0
      %1948 = vmatprep.mubr.f32.mxu0 0.0
      %1949 = vmatmul.mubr.f32.gmra.mxu0 %v360
      %v1950 = vpop.f32.mrf.mxu0
      %v1951 = vadd.f32 %v1181, %v1950
      %v1952 = vpop.f32.mrf.mxu0
      %1953 = vmatprep.mubr.f32.mxu0 0.0
      %1954 = vmatmul.mubr.f32.gmra.mxu0 %v361
      %v1955 = vpop.f32.mrf.mxu0
      %v1956 = vadd.f32 %v1186, %v1955
      %v1957 = vpop.f32.mrf.mxu0
      %1958 = vmatprep.mubr.f32.mxu0 0.0
      %1959 = vmatmul.mubr.f32.gmra.mxu0 %v362
      %v1960 = vpop.f32.mrf.mxu0
      %v1961 = vadd.f32 %v1191, %v1960
      %v1962 = vpop.f32.mrf.mxu0
      %1963 = vmatprep.mubr.f32.mxu0 0.0
      %1964 = vmatmul.mubr.f32.gmra.mxu0 %v363
      %v1965 = vpop.f32.mrf.mxu0
      %v1966 = vadd.f32 %v1196, %v1965
      %v1967 = vpop.f32.mrf.mxu0
      %1968 = vmatprep.mubr.f32.mxu0 0.0
      %1969 = vmatmul.mubr.f32.gmra.mxu0 %v364
      %v1970 = vpop.f32.mrf.mxu0
      %v1971 = vadd.f32 %v1201, %v1970
      %v1972 = vpop.f32.mrf.mxu0
      %1973 = vmatprep.mubr.f32.mxu0 0.0
      %1974 = vmatmul.mubr.f32.gmra.mxu0 %v365
      %v1975 = vpop.f32.mrf.mxu0
      %v1976 = vadd.f32 %v1206, %v1975
      %v1977 = vpop.f32.mrf.mxu0
      %1978 = vmatprep.mubr.f32.mxu0 0.0
      %1979 = vmatmul.mubr.f32.gmra.mxu0 %v366
      %v1980 = vpop.f32.mrf.mxu0
      %v1981 = vadd.f32 %v1211, %v1980
      %v1982 = vpop.f32.mrf.mxu0
      %1983 = vmatprep.mubr.f32.mxu0 0.0
      %1984 = vmatmul.mubr.f32.gmra.mxu0 %v367
      %v1985 = vpop.f32.mrf.mxu0
      %v1986 = vadd.f32 %v1216, %v1985
      %v1987 = vpop.f32.mrf.mxu0
      %1988 = vmatprep.mubr.f32.mxu0 0.0
      %1989 = vmatmul.mubr.f32.gmra.mxu0 %v368
      %v1990 = vpop.f32.mrf.mxu0
      %v1991 = vadd.f32 %v1221, %v1990
      %v1992 = vpop.f32.mrf.mxu0
      %1993 = vmatprep.mubr.f32.mxu0 0.0
      %1994 = vmatmul.mubr.f32.gmra.mxu0 %v369
      %v1995 = vpop.f32.mrf.mxu0
      %v1996 = vadd.f32 %v1226, %v1995
      %v1997 = vpop.f32.mrf.mxu0
      %1998 = vmatprep.mubr.f32.mxu0 0.0
      %1999 = vmatmul.mubr.f32.gmra.mxu0 %v370
      %v2000 = vpop.f32.mrf.mxu0
      %v2001 = vadd.f32 %v1231, %v2000
      %v2002 = vpop.f32.mrf.mxu0
      %2003 = vmatprep.mubr.f32.mxu0 0.0
      %2004 = vmatmul.mubr.f32.gmra.mxu0 %v371
      %v2005 = vpop.f32.mrf.mxu0
      %v2006 = vadd.f32 %v1236, %v2005
      %v2007 = vpop.f32.mrf.mxu0
      %2008 = vmatprep.mubr.f32.mxu0 0.0
      %2009 = vmatmul.mubr.f32.gmra.mxu0 %v372
      %v2010 = vpop.f32.mrf.mxu0
      %v2011 = vadd.f32 %v1241, %v2010
      %v2012 = vpop.f32.mrf.mxu0
      %2013 = vmatprep.mubr.f32.mxu0 0.0
      %2014 = vmatmul.mubr.f32.gmra.mxu0 %v373
      %v2015 = vpop.f32.mrf.mxu0
      %v2016 = vadd.f32 %v1246, %v2015
      %v2017 = vpop.f32.mrf.mxu0
      %2018 = vmatprep.mubr.f32.mxu0 0.0
      %2019 = vmatmul.mubr.f32.gmra.mxu0 %v374
      %v2020 = vpop.f32.mrf.mxu0
      %v2021 = vadd.f32 %v1251, %v2020
      %v2022 = vpop.f32.mrf.mxu0
      %2023 = vmatprep.mubr.f32.mxu0 0.0
      %2024 = vmatmul.mubr.f32.gmra.mxu0 %v375
      %v2025 = vpop.f32.mrf.mxu0
      %v2026 = vadd.f32 %v1256, %v2025
      %v2027 = vpop.f32.mrf.mxu0
      %2028 = vmatprep.mubr.f32.mxu0 0.0
      %2029 = vmatmul.mubr.f32.gmra.mxu0 %v376
      %v2030 = vpop.f32.mrf.mxu0
      %v2031 = vadd.f32 %v1261, %v2030
      %v2032 = vpop.f32.mrf.mxu0
      %2033 = vmatprep.mubr.f32.mxu0 0.0
      %2034 = vmatmul.mubr.f32.gmra.mxu0 %v377
      %v2035 = vpop.f32.mrf.mxu0
      %v2036 = vadd.f32 %v1266, %v2035
      %v2037 = vpop.f32.mrf.mxu0
      %2038 = vmatprep.mubr.f32.mxu0 0.0
      %2039 = vmatmul.mubr.f32.gmra.mxu0 %v378
      %v2040 = vpop.f32.mrf.mxu0
      %v2041 = vadd.f32 %v1271, %v2040
      %v2042 = vpop.f32.mrf.mxu0
      %2043 = vmatprep.mubr.f32.mxu0 0.0
      %2044 = vmatmul.mubr.f32.gmra.mxu0 %v379
      %v2045 = vpop.f32.mrf.mxu0
      %v2046 = vadd.f32 %v1276, %v2045
      %v2047 = vpop.f32.mrf.mxu0
      %2048 = vmatprep.mubr.f32.mxu0 0.0
      %2049 = vmatmul.mubr.f32.gmra.mxu0 %v380
      %v2050 = vpop.f32.mrf.mxu0
      %v2051 = vadd.f32 %v1281, %v2050
      %v2052 = vpop.f32.mrf.mxu0
      %2053 = vmatprep.mubr.f32.mxu0 0.0
      %2054 = vmatmul.mubr.f32.gmra.mxu0 %v381
      %v2055 = vpop.f32.mrf.mxu0
      %v2056 = vadd.f32 %v1286, %v2055
      %v2057 = vpop.f32.mrf.mxu0
      %2058 = vmatprep.mubr.f32.mxu0 0.0
      %2059 = vmatmul.mubr.f32.gmra.mxu0 %v382
      %v2060 = vpop.f32.mrf.mxu0
      %v2061 = vadd.f32 %v1291, %v2060
      %v2062 = vpop.f32.mrf.mxu0
      %2063 = vmatprep.mubr.f32.mxu0 0.0
      %2064 = vmatmul.mubr.f32.gmra.mxu0 %v383
      %v2065 = vpop.f32.mrf.mxu0
      %v2066 = vadd.f32 %v1296, %v2065
      %v2067 = vpop.f32.mrf.mxu0
      %2068 = vmatprep.mubr.f32.mxu0 0.0
      %2069 = vmatmul.mubr.f32.gmra.mxu0 %v384
      %v2070 = vpop.f32.mrf.mxu0
      %v2071 = vadd.f32 %v1301, %v2070
      %v2072 = vpop.f32.mrf.mxu0
      %2073 = vmatprep.mubr.f32.mxu0 0.0
      %2074 = vmatmul.mubr.f32.gmra.mxu0 %v385
      %v2075 = vpop.f32.mrf.mxu0
      %v2076 = vadd.f32 %v1306, %v2075
      %v2077 = vpop.f32.mrf.mxu0
      %2078 = vmatprep.mubr.f32.mxu0 0.0
      %2079 = vmatmul.mubr.f32.gmra.mxu0 %v386
      %v2080 = vpop.f32.mrf.mxu0
      %v2081 = vadd.f32 %v1311, %v2080
      %v2082 = vpop.f32.mrf.mxu0
      %2083 = vmatprep.mubr.f32.mxu0 0.0
      %2084 = vmatmul.mubr.f32.gmra.mxu0 %v387
      %v2085 = vpop.f32.mrf.mxu0
      %v2086 = vadd.f32 %v1316, %v2085
      %v2087 = vpop.f32.mrf.mxu0
      %2088 = vmatprep.mubr.f32.mxu0 0.0
      %2089 = vmatmul.mubr.f32.gmra.mxu0 %v388
      %v2090 = vpop.f32.mrf.mxu0
      %v2091 = vadd.f32 %v1321, %v2090
      %v2092 = vpop.f32.mrf.mxu0
      %2093 = vmatprep.mubr.f32.mxu0 0.0
      %2094 = vmatmul.mubr.f32.gmra.mxu0 %v389
      %v2095 = vpop.f32.mrf.mxu0
      %v2096 = vadd.f32 %v1326, %v2095
      %v2097 = vpop.f32.mrf.mxu0
      %2098 = vmatprep.mubr.f32.mxu0 0.0
      %2099 = vmatmul.mubr.f32.gmra.mxu0 %v390
      %v2100 = vpop.f32.mrf.mxu0
      %v2101 = vadd.f32 %v1331, %v2100
      %v2102 = vpop.f32.mrf.mxu0
      %2103 = vdwg.mxu0
      %v2104 = vld [vmem:[%s4] sm:$0x1]
      %v2106 = vlaneseq
      %v2107 = vshrl.u32 %v2106, 7
      %v2108 = vsub.s32 0, %v2107
      %v2109 = vrot.slane %v2104, %v2108
      %v2111 = vadd.f32 %v1401, %v2109
      %v2112 = vadd.f32 %v1406, %v2109
      %v2113 = vadd.f32 %v1411, %v2109
      %v2114 = vadd.f32 %v1416, %v2109
      %v2115 = vadd.f32 %v1421, %v2109
      %v2116 = vadd.f32 %v1426, %v2109
      %v2117 = vadd.f32 %v1431, %v2109
      %v2118 = vadd.f32 %v1436, %v2109
      %v2119 = vadd.f32 %v1441, %v2109
      %v2120 = vadd.f32 %v1446, %v2109
      %v2121 = vadd.f32 %v1451, %v2109
      %v2122 = vadd.f32 %v1456, %v2109
      %v2123 = vadd.f32 %v1461, %v2109
      %v2124 = vadd.f32 %v1466, %v2109
      %v2125 = vadd.f32 %v1471, %v2109
      %v2126 = vadd.f32 %v1476, %v2109
      %v2127 = vadd.f32 %v1481, %v2109
      %v2128 = vadd.f32 %v1486, %v2109
      %v2129 = vadd.f32 %v1491, %v2109
      %v2130 = vadd.f32 %v1496, %v2109
      %v2131 = vadd.f32 %v1501, %v2109
      %v2132 = vadd.f32 %v1506, %v2109
      %v2133 = vadd.f32 %v1511, %v2109
      %v2134 = vadd.f32 %v1516, %v2109
      %v2135 = vadd.f32 %v1521, %v2109
      %v2136 = vadd.f32 %v1526, %v2109
      %v2137 = vadd.f32 %v1531, %v2109
      %v2138 = vadd.f32 %v1536, %v2109
      %v2139 = vadd.f32 %v1541, %v2109
      %v2140 = vadd.f32 %v1546, %v2109
      %v2141 = vadd.f32 %v1551, %v2109
      %v2142 = vadd.f32 %v1556, %v2109
      %v2143 = vadd.f32 %v1561, %v2109
      %v2144 = vadd.f32 %v1566, %v2109
      %v2145 = vadd.f32 %v1571, %v2109
      %v2146 = vadd.f32 %v1576, %v2109
      %v2147 = vadd.f32 %v1581, %v2109
      %v2148 = vadd.f32 %v1586, %v2109
      %v2149 = vadd.f32 %v1591, %v2109
      %v2150 = vadd.f32 %v1596, %v2109
      %v2151 = vadd.f32 %v1601, %v2109
      %v2152 = vadd.f32 %v1606, %v2109
      %v2153 = vadd.f32 %v1611, %v2109
      %v2154 = vadd.f32 %v1616, %v2109
      %v2155 = vadd.f32 %v1621, %v2109
      %v2156 = vadd.f32 %v1626, %v2109
      %v2157 = vadd.f32 %v1631, %v2109
      %v2158 = vadd.f32 %v1636, %v2109
      %v2159 = vadd.f32 %v1641, %v2109
      %v2160 = vadd.f32 %v1646, %v2109
      %v2161 = vadd.f32 %v1651, %v2109
      %v2162 = vadd.f32 %v1656, %v2109
      %v2163 = vadd.f32 %v1661, %v2109
      %v2164 = vadd.f32 %v1666, %v2109
      %v2165 = vadd.f32 %v1671, %v2109
      %v2166 = vadd.f32 %v1676, %v2109
      %v2167 = vadd.f32 %v1681, %v2109
      %v2168 = vadd.f32 %v1686, %v2109
      %v2169 = vadd.f32 %v1691, %v2109
      %v2170 = vadd.f32 %v1696, %v2109
      %v2171 = vadd.f32 %v1701, %v2109
      %v2172 = vadd.f32 %v1706, %v2109
      %v2173 = vadd.f32 %v1711, %v2109
      %v2174 = vadd.f32 %v1716, %v2109
      %v2175 = vadd.f32 %v1721, %v2109
      %v2176 = vadd.f32 %v1726, %v2109
      %v2177 = vadd.f32 %v1731, %v2109
      %v2178 = vadd.f32 %v1736, %v2109
      %v2179 = vadd.f32 %v1741, %v2109
      %v2180 = vadd.f32 %v1746, %v2109
      %v2181 = vadd.f32 %v1751, %v2109
      %v2182 = vadd.f32 %v1756, %v2109
      %v2183 = vadd.f32 %v1761, %v2109
      %v2184 = vadd.f32 %v1766, %v2109
      %v2185 = vadd.f32 %v1771, %v2109
      %v2186 = vadd.f32 %v1776, %v2109
      %v2187 = vadd.f32 %v1781, %v2109
      %v2188 = vadd.f32 %v1786, %v2109
      %v2189 = vadd.f32 %v1791, %v2109
      %v2190 = vadd.f32 %v1796, %v2109
      %v2191 = vadd.f32 %v1801, %v2109
      %v2192 = vadd.f32 %v1806, %v2109
      %v2193 = vadd.f32 %v1811, %v2109
      %v2194 = vadd.f32 %v1816, %v2109
      %v2195 = vadd.f32 %v1821, %v2109
      %v2196 = vadd.f32 %v1826, %v2109
      %v2197 = vadd.f32 %v1831, %v2109
      %v2198 = vadd.f32 %v1836, %v2109
      %v2199 = vadd.f32 %v1841, %v2109
      %v2200 = vadd.f32 %v1846, %v2109
      %v2201 = vadd.f32 %v1851, %v2109
      %v2202 = vadd.f32 %v1856, %v2109
      %v2203 = vadd.f32 %v1861, %v2109
      %v2204 = vadd.f32 %v1866, %v2109
      %v2205 = vadd.f32 %v1871, %v2109
      %v2206 = vadd.f32 %v1876, %v2109
      %v2207 = vadd.f32 %v1881, %v2109
      %v2208 = vadd.f32 %v1886, %v2109
      %v2209 = vadd.f32 %v1891, %v2109
      %v2210 = vadd.f32 %v1896, %v2109
      %v2211 = vadd.f32 %v1901, %v2109
      %v2212 = vadd.f32 %v1906, %v2109
      %v2213 = vadd.f32 %v1911, %v2109
      %v2214 = vadd.f32 %v1916, %v2109
      %v2215 = vadd.f32 %v1921, %v2109
      %v2216 = vadd.f32 %v1926, %v2109
      %v2217 = vadd.f32 %v1931, %v2109
      %v2218 = vadd.f32 %v1936, %v2109
      %v2219 = vadd.f32 %v1941, %v2109
      %v2220 = vadd.f32 %v1946, %v2109
      %v2221 = vadd.f32 %v1951, %v2109
      %v2222 = vadd.f32 %v1956, %v2109
      %v2223 = vadd.f32 %v1961, %v2109
      %v2224 = vadd.f32 %v1966, %v2109
      %v2225 = vadd.f32 %v1971, %v2109
      %v2226 = vadd.f32 %v1976, %v2109
      %v2227 = vadd.f32 %v1981, %v2109
      %v2228 = vadd.f32 %v1986, %v2109
      %v2229 = vadd.f32 %v1991, %v2109
      %v2230 = vadd.f32 %v1996, %v2109
      %v2231 = vadd.f32 %v2001, %v2109
      %v2232 = vadd.f32 %v2006, %v2109
      %v2233 = vadd.f32 %v2011, %v2109
      %v2234 = vadd.f32 %v2016, %v2109
      %v2235 = vadd.f32 %v2021, %v2109
      %v2236 = vadd.f32 %v2026, %v2109
      %v2237 = vadd.f32 %v2031, %v2109
      %v2238 = vadd.f32 %v2036, %v2109
      %v2239 = vadd.f32 %v2041, %v2109
      %v2240 = vadd.f32 %v2046, %v2109
      %v2241 = vadd.f32 %v2051, %v2109
      %v2242 = vadd.f32 %v2056, %v2109
      %v2243 = vadd.f32 %v2061, %v2109
      %v2244 = vadd.f32 %v2066, %v2109
      %v2245 = vadd.f32 %v2071, %v2109
      %v2246 = vadd.f32 %v2076, %v2109
      %v2247 = vadd.f32 %v2081, %v2109
      %v2248 = vadd.f32 %v2086, %v2109
      %v2249 = vadd.f32 %v2091, %v2109
      %v2250 = vadd.f32 %v2096, %v2109
      %v2251 = vadd.f32 %v2101, %v2109
      %v2252 = vmax.f32 %v2111, 0.0
      %v2253 = vmax.f32 %v2112, 0.0
      %v2254 = vmax.f32 %v2113, 0.0
      %v2255 = vmax.f32 %v2114, 0.0
      %v2256 = vmax.f32 %v2115, 0.0
      %v2257 = vmax.f32 %v2116, 0.0
      %v2258 = vmax.f32 %v2117, 0.0
      %v2259 = vmax.f32 %v2118, 0.0
      %v2260 = vmax.f32 %v2119, 0.0
      %v2261 = vmax.f32 %v2120, 0.0
      %v2262 = vmax.f32 %v2121, 0.0
      %v2263 = vmax.f32 %v2122, 0.0
      %v2264 = vmax.f32 %v2123, 0.0
      %v2265 = vmax.f32 %v2124, 0.0
      %v2266 = vmax.f32 %v2125, 0.0
      %v2267 = vmax.f32 %v2126, 0.0
      %v2268 = vmax.f32 %v2127, 0.0
      %v2269 = vmax.f32 %v2128, 0.0
      %v2270 = vmax.f32 %v2129, 0.0
      %v2271 = vmax.f32 %v2130, 0.0
      %v2272 = vmax.f32 %v2131, 0.0
      %v2273 = vmax.f32 %v2132, 0.0
      %v2274 = vmax.f32 %v2133, 0.0
      %v2275 = vmax.f32 %v2134, 0.0
      %v2276 = vmax.f32 %v2135, 0.0
      %v2277 = vmax.f32 %v2136, 0.0
      %v2278 = vmax.f32 %v2137, 0.0
      %v2279 = vmax.f32 %v2138, 0.0
      %v2280 = vmax.f32 %v2139, 0.0
      %v2281 = vmax.f32 %v2140, 0.0
      %v2282 = vmax.f32 %v2141, 0.0
      %v2283 = vmax.f32 %v2142, 0.0
      %v2284 = vmax.f32 %v2143, 0.0
      %v2285 = vmax.f32 %v2144, 0.0
      %v2286 = vmax.f32 %v2145, 0.0
      %v2287 = vmax.f32 %v2146, 0.0
      %v2288 = vmax.f32 %v2147, 0.0
      %v2289 = vmax.f32 %v2148, 0.0
      %v2290 = vmax.f32 %v2149, 0.0
      %v2291 = vmax.f32 %v2150, 0.0
      %v2292 = vmax.f32 %v2151, 0.0
      %v2293 = vmax.f32 %v2152, 0.0
      %v2294 = vmax.f32 %v2153, 0.0
      %v2295 = vmax.f32 %v2154, 0.0
      %v2296 = vmax.f32 %v2155, 0.0
      %v2297 = vmax.f32 %v2156, 0.0
      %v2298 = vmax.f32 %v2157, 0.0
      %v2299 = vmax.f32 %v2158, 0.0
      %v2300 = vmax.f32 %v2159, 0.0
      %v2301 = vmax.f32 %v2160, 0.0
      %v2302 = vmax.f32 %v2161, 0.0
      %v2303 = vmax.f32 %v2162, 0.0
      %v2304 = vmax.f32 %v2163, 0.0
      %v2305 = vmax.f32 %v2164, 0.0
      %v2306 = vmax.f32 %v2165, 0.0
      %v2307 = vmax.f32 %v2166, 0.0
      %v2308 = vmax.f32 %v2167, 0.0
      %v2309 = vmax.f32 %v2168, 0.0
      %v2310 = vmax.f32 %v2169, 0.0
      %v2311 = vmax.f32 %v2170, 0.0
      %v2312 = vmax.f32 %v2171, 0.0
      %v2313 = vmax.f32 %v2172, 0.0
      %v2314 = vmax.f32 %v2173, 0.0
      %v2315 = vmax.f32 %v2174, 0.0
      %v2316 = vmax.f32 %v2175, 0.0
      %v2317 = vmax.f32 %v2176, 0.0
      %v2318 = vmax.f32 %v2177, 0.0
      %v2319 = vmax.f32 %v2178, 0.0
      %v2320 = vmax.f32 %v2179, 0.0
      %v2321 = vmax.f32 %v2180, 0.0
      %v2322 = vmax.f32 %v2181, 0.0
      %v2323 = vmax.f32 %v2182, 0.0
      %v2324 = vmax.f32 %v2183, 0.0
      %v2325 = vmax.f32 %v2184, 0.0
      %v2326 = vmax.f32 %v2185, 0.0
      %v2327 = vmax.f32 %v2186, 0.0
      %v2328 = vmax.f32 %v2187, 0.0
      %v2329 = vmax.f32 %v2188, 0.0
      %v2330 = vmax.f32 %v2189, 0.0
      %v2331 = vmax.f32 %v2190, 0.0
      %v2332 = vmax.f32 %v2191, 0.0
      %v2333 = vmax.f32 %v2192, 0.0
      %v2334 = vmax.f32 %v2193, 0.0
      %v2335 = vmax.f32 %v2194, 0.0
      %v2336 = vmax.f32 %v2195, 0.0
      %v2337 = vmax.f32 %v2196, 0.0
      %v2338 = vmax.f32 %v2197, 0.0
      %v2339 = vmax.f32 %v2198, 0.0
      %v2340 = vmax.f32 %v2199, 0.0
      %v2341 = vmax.f32 %v2200, 0.0
      %v2342 = vmax.f32 %v2201, 0.0
      %v2343 = vmax.f32 %v2202, 0.0
      %v2344 = vmax.f32 %v2203, 0.0
      %v2345 = vmax.f32 %v2204, 0.0
      %v2346 = vmax.f32 %v2205, 0.0
      %v2347 = vmax.f32 %v2206, 0.0
      %v2348 = vmax.f32 %v2207, 0.0
      %v2349 = vmax.f32 %v2208, 0.0
      %v2350 = vmax.f32 %v2209, 0.0
      %v2351 = vmax.f32 %v2210, 0.0
      %v2352 = vmax.f32 %v2211, 0.0
      %v2353 = vmax.f32 %v2212, 0.0
      %v2354 = vmax.f32 %v2213, 0.0
      %v2355 = vmax.f32 %v2214, 0.0
      %v2356 = vmax.f32 %v2215, 0.0
      %v2357 = vmax.f32 %v2216, 0.0
      %v2358 = vmax.f32 %v2217, 0.0
      %v2359 = vmax.f32 %v2218, 0.0
      %v2360 = vmax.f32 %v2219, 0.0
      %v2361 = vmax.f32 %v2220, 0.0
      %v2362 = vmax.f32 %v2221, 0.0
      %v2363 = vmax.f32 %v2222, 0.0
      %v2364 = vmax.f32 %v2223, 0.0
      %v2365 = vmax.f32 %v2224, 0.0
      %v2366 = vmax.f32 %v2225, 0.0
      %v2367 = vmax.f32 %v2226, 0.0
      %v2368 = vmax.f32 %v2227, 0.0
      %v2369 = vmax.f32 %v2228, 0.0
      %v2370 = vmax.f32 %v2229, 0.0
      %v2371 = vmax.f32 %v2230, 0.0
      %v2372 = vmax.f32 %v2231, 0.0
      %v2373 = vmax.f32 %v2232, 0.0
      %v2374 = vmax.f32 %v2233, 0.0
      %v2375 = vmax.f32 %v2234, 0.0
      %v2376 = vmax.f32 %v2235, 0.0
      %v2377 = vmax.f32 %v2236, 0.0
      %v2378 = vmax.f32 %v2237, 0.0
      %v2379 = vmax.f32 %v2238, 0.0
      %v2380 = vmax.f32 %v2239, 0.0
      %v2381 = vmax.f32 %v2240, 0.0
      %v2382 = vmax.f32 %v2241, 0.0
      %v2383 = vmax.f32 %v2242, 0.0
      %v2384 = vmax.f32 %v2243, 0.0
      %v2385 = vmax.f32 %v2244, 0.0
      %v2386 = vmax.f32 %v2245, 0.0
      %v2387 = vmax.f32 %v2246, 0.0
      %v2388 = vmax.f32 %v2247, 0.0
      %v2389 = vmax.f32 %v2248, 0.0
      %v2390 = vmax.f32 %v2249, 0.0
      %v2391 = vmax.f32 %v2250, 0.0
      %v2392 = vmax.f32 %v2251, 0.0
      %2393 = vst [vmem:[%s248] sm:$0xff] %v2252
      %2394 = vst [vmem:[%s248 + $0x8] sm:$0xff] %v2253
      %2395 = vst [vmem:[%s248 + $0x10] sm:$0xff] %v2254
      %2396 = vst [vmem:[%s248 + $0x18] sm:$0xff] %v2255
      %2397 = vst [vmem:[%s248 + $0x20] sm:$0xff] %v2256
      %2398 = vst [vmem:[%s248 + $0x28] sm:$0xff] %v2257
      %2399 = vst [vmem:[%s248 + $0x30] sm:$0xff] %v2258
      %2400 = vst [vmem:[%s248 + $0x38] sm:$0xff] %v2259
      %2401 = vst [vmem:[%s248 + $0x40] sm:$0xff] %v2260
      %2402 = vst [vmem:[%s248 + $0x48] sm:$0xff] %v2261
      %2403 = vst [vmem:[%s248 + $0x50] sm:$0xff] %v2262
      %2404 = vst [vmem:[%s248 + $0x58] sm:$0xff] %v2263
      %2405 = vst [vmem:[%s248 + $0x60] sm:$0xff] %v2264
      %2406 = vst [vmem:[%s248 + $0x68] sm:$0xff] %v2265
      %2407 = vst [vmem:[%s248 + $0x70] sm:$0xff] %v2266
      %2408 = vst [vmem:[%s248 + $0x78] sm:$0xff] %v2267
      %2409 = vst [vmem:[%s248 + $0x80] sm:$0xff] %v2268
      %2410 = vst [vmem:[%s248 + $0x88] sm:$0xff] %v2269
      %2411 = vst [vmem:[%s248 + $0x90] sm:$0xff] %v2270
      %2412 = vst [vmem:[%s248 + $0x98] sm:$0xff] %v2271
      %2413 = vst [vmem:[%s248 + $0xa0] sm:$0xff] %v2272
      %2414 = vst [vmem:[%s248 + $0xa8] sm:$0xff] %v2273
      %2415 = vst [vmem:[%s248 + $0xb0] sm:$0xff] %v2274
      %2416 = vst [vmem:[%s248 + $0xb8] sm:$0xff] %v2275
      %2417 = vst [vmem:[%s248 + $0xc0] sm:$0xff] %v2276
      %2418 = vst [vmem:[%s248 + $0xc8] sm:$0xff] %v2277
      %2419 = vst [vmem:[%s248 + $0xd0] sm:$0xff] %v2278
      %2420 = vst [vmem:[%s248 + $0xd8] sm:$0xff] %v2279
      %2421 = vst [vmem:[%s248 + $0xe0] sm:$0xff] %v2280
      %2422 = vst [vmem:[%s248 + $0xe8] sm:$0xff] %v2281
      %2423 = vst [vmem:[%s248 + $0xf0] sm:$0xff] %v2282
      %2424 = vst [vmem:[%s248 + $0xf8] sm:$0xff] %v2283
      %2425 = vst [vmem:[%s248 + $0x100] sm:$0xff] %v2284
      %2426 = vst [vmem:[%s248 + $0x108] sm:$0xff] %v2285
      %2427 = vst [vmem:[%s248 + $0x110] sm:$0xff] %v2286
      %2428 = vst [vmem:[%s248 + $0x118] sm:$0xff] %v2287
      %2429 = vst [vmem:[%s248 + $0x120] sm:$0xff] %v2288
      %2430 = vst [vmem:[%s248 + $0x128] sm:$0xff] %v2289
      %2431 = vst [vmem:[%s248 + $0x130] sm:$0xff] %v2290
      %2432 = vst [vmem:[%s248 + $0x138] sm:$0xff] %v2291
      %2433 = vst [vmem:[%s248 + $0x140] sm:$0xff] %v2292
      %2434 = vst [vmem:[%s248 + $0x148] sm:$0xff] %v2293
      %2435 = vst [vmem:[%s248 + $0x150] sm:$0xff] %v2294
      %2436 = vst [vmem:[%s248 + $0x158] sm:$0xff] %v2295
      %2437 = vst [vmem:[%s248 + $0x160] sm:$0xff] %v2296
      %2438 = vst [vmem:[%s248 + $0x168] sm:$0xff] %v2297
      %2439 = vst [vmem:[%s248 + $0x170] sm:$0xff] %v2298
      %2440 = vst [vmem:[%s248 + $0x178] sm:$0xff] %v2299
      %2441 = vst [vmem:[%s248 + $0x180] sm:$0xff] %v2300
      %2442 = vst [vmem:[%s248 + $0x188] sm:$0xff] %v2301
      %2443 = vst [vmem:[%s248 + $0x190] sm:$0xff] %v2302
      %2444 = vst [vmem:[%s248 + $0x198] sm:$0xff] %v2303
      %2445 = vst [vmem:[%s248 + $0x1a0] sm:$0xff] %v2304
      %2446 = vst [vmem:[%s248 + $0x1a8] sm:$0xff] %v2305
      %2447 = vst [vmem:[%s248 + $0x1b0] sm:$0xff] %v2306
      %2448 = vst [vmem:[%s248 + $0x1b8] sm:$0xff] %v2307
      %2449 = vst [vmem:[%s248 + $0x1c0] sm:$0xff] %v2308
      %2450 = vst [vmem:[%s248 + $0x1c8] sm:$0xff] %v2309
      %2451 = vst [vmem:[%s248 + $0x1d0] sm:$0xff] %v2310
      %2452 = vst [vmem:[%s248 + $0x1d8] sm:$0xff] %v2311
      %2453 = vst [vmem:[%s248 + $0x1e0] sm:$0xff] %v2312
      %2454 = vst [vmem:[%s248 + $0x1e8] sm:$0xff] %v2313
      %2455 = vst [vmem:[%s248 + $0x1f0] sm:$0xff] %v2314
      %2456 = vst [vmem:[%s248 + $0x1f8] sm:$0xff] %v2315
      %2457 = vst [vmem:[%s248 + $0x200] sm:$0xff] %v2316
      %2458 = vst [vmem:[%s248 + $0x208] sm:$0xff] %v2317
      %2459 = vst [vmem:[%s248 + $0x210] sm:$0xff] %v2318
      %2460 = vst [vmem:[%s248 + $0x218] sm:$0xff] %v2319
      %2461 = vst [vmem:[%s248 + $0x220] sm:$0xff] %v2320
      %2462 = vst [vmem:[%s248 + $0x228] sm:$0xff] %v2321
      %2463 = vst [vmem:[%s248 + $0x230] sm:$0xff] %v2322
      %2464 = vst [vmem:[%s248 + $0x238] sm:$0xff] %v2323
      %2465 = vst [vmem:[%s248 + $0x240] sm:$0xff] %v2324
      %2466 = vst [vmem:[%s248 + $0x248] sm:$0xff] %v2325
      %2467 = vst [vmem:[%s248 + $0x250] sm:$0xff] %v2326
      %2468 = vst [vmem:[%s248 + $0x258] sm:$0xff] %v2327
      %2469 = vst [vmem:[%s248 + $0x260] sm:$0xff] %v2328
      %2470 = vst [vmem:[%s248 + $0x268] sm:$0xff] %v2329
      %2471 = vst [vmem:[%s248 + $0x270] sm:$0xff] %v2330
      %2472 = vst [vmem:[%s248 + $0x278] sm:$0xff] %v2331
      %2473 = vst [vmem:[%s248 + $0x280] sm:$0xff] %v2332
      %2474 = vst [vmem:[%s248 + $0x288] sm:$0xff] %v2333
      %2475 = vst [vmem:[%s248 + $0x290] sm:$0xff] %v2334
      %2476 = vst [vmem:[%s248 + $0x298] sm:$0xff] %v2335
      %2477 = vst [vmem:[%s248 + $0x2a0] sm:$0xff] %v2336
      %2478 = vst [vmem:[%s248 + $0x2a8] sm:$0xff] %v2337
      %2479 = vst [vmem:[%s248 + $0x2b0] sm:$0xff] %v2338
      %2480 = vst [vmem:[%s248 + $0x2b8] sm:$0xff] %v2339
      %2481 = vst [vmem:[%s248 + $0x2c0] sm:$0xff] %v2340
      %2482 = vst [vmem:[%s248 + $0x2c8] sm:$0xff] %v2341
      %2483 = vst [vmem:[%s248 + $0x2d0] sm:$0xff] %v2342
      %2484 = vst [vmem:[%s248 + $0x2d8] sm:$0xff] %v2343
      %2485 = vst [vmem:[%s248 + $0x2e0] sm:$0xff] %v2344
      %2486 = vst [vmem:[%s248 + $0x2e8] sm:$0xff] %v2345
      %2487 = vst [vmem:[%s248 + $0x2f0] sm:$0xff] %v2346
      %2488 = vst [vmem:[%s248 + $0x2f8] sm:$0xff] %v2347
      %2489 = vst [vmem:[%s248 + $0x300] sm:$0xff] %v2348
      %2490 = vst [vmem:[%s248 + $0x308] sm:$0xff] %v2349
      %2491 = vst [vmem:[%s248 + $0x310] sm:$0xff] %v2350
      %2492 = vst [vmem:[%s248 + $0x318] sm:$0xff] %v2351
      %2493 = vst [vmem:[%s248 + $0x320] sm:$0xff] %v2352
      %2494 = vst [vmem:[%s248 + $0x328] sm:$0xff] %v2353
      %2495 = vst [vmem:[%s248 + $0x330] sm:$0xff] %v2354
      %2496 = vst [vmem:[%s248 + $0x338] sm:$0xff] %v2355
      %2497 = vst [vmem:[%s248 + $0x340] sm:$0xff] %v2356
      %2498 = vst [vmem:[%s248 + $0x348] sm:$0xff] %v2357
      %2499 = vst [vmem:[%s248 + $0x350] sm:$0xff] %v2358
      %2500 = vst [vmem:[%s248 + $0x358] sm:$0xff] %v2359
      %2501 = vst [vmem:[%s248 + $0x360] sm:$0xff] %v2360
      %2502 = vst [vmem:[%s248 + $0x368] sm:$0xff] %v2361
      %2503 = vst [vmem:[%s248 + $0x370] sm:$0xff] %v2362
      %2504 = vst [vmem:[%s248 + $0x378] sm:$0xff] %v2363
      %2505 = vst [vmem:[%s248 + $0x380] sm:$0xff] %v2364
      %2506 = vst [vmem:[%s248 + $0x388] sm:$0xff] %v2365
      %2507 = vst [vmem:[%s248 + $0x390] sm:$0xff] %v2366
      %2508 = vst [vmem:[%s248 + $0x398] sm:$0xff] %v2367
      %2509 = vst [vmem:[%s248 + $0x3a0] sm:$0xff] %v2368
      %2510 = vst [vmem:[%s248 + $0x3a8] sm:$0xff] %v2369
      %2511 = vst [vmem:[%s248 + $0x3b0] sm:$0xff] %v2370
      %2512 = vst [vmem:[%s248 + $0x3b8] sm:$0xff] %v2371
      %2513 = vst [vmem:[%s248 + $0x3c0] sm:$0xff] %v2372
      %2514 = vst [vmem:[%s248 + $0x3c8] sm:$0xff] %v2373
      %2515 = vst [vmem:[%s248 + $0x3d0] sm:$0xff] %v2374
      %2516 = vst [vmem:[%s248 + $0x3d8] sm:$0xff] %v2375
      %2517 = vst [vmem:[%s248 + $0x3e0] sm:$0xff] %v2376
      %2518 = vst [vmem:[%s248 + $0x3e8] sm:$0xff] %v2377
      %2519 = vst [vmem:[%s248 + $0x3f0] sm:$0xff] %v2378
      %2520 = vst [vmem:[%s248 + $0x3f8] sm:$0xff] %v2379
      %2521 = vst [vmem:[%s248 + $0x400] sm:$0xff] %v2380
      %2522 = vst [vmem:[%s248 + $0x408] sm:$0xff] %v2381
      %2523 = vst [vmem:[%s248 + $0x410] sm:$0xff] %v2382
      %2524 = vst [vmem:[%s248 + $0x418] sm:$0xff] %v2383
      %2525 = vst [vmem:[%s248 + $0x420] sm:$0xff] %v2384
      %2526 = vst [vmem:[%s248 + $0x428] sm:$0xff] %v2385
      %2527 = vst [vmem:[%s248 + $0x430] sm:$0xff] %v2386
      %2528 = vst [vmem:[%s248 + $0x438] sm:$0xff] %v2387
      %2529 = vst [vmem:[%s248 + $0x440] sm:$0xff] %v2388
      %2530 = vst [vmem:[%s248 + $0x448] sm:$0xff] %v2389
      %2531 = vst [vmem:[%s248 + $0x450] sm:$0xff] %v2390
      %2532 = vst [vmem:[%s248 + $0x458] sm:$0xff] %v2391
      %2533 = vst [vmem:[%s248 + $0x460] sm:$0xff] %v2392
      %s2534 = smul.u32 141, %s16
      %p2535 = scmp.lt.s32.totalorder %s2534, 281
      %s2536 = scalar_select %p2535, %s2534, 281
      %s2537 = smul.addr %s2536, 8
      %s2538 = scalar_lea.vmem %s5, %s2537
      // Predicated region
      $region41: #{_compare_pallas.1} parent=39 // pred_check
        %p2539 = pneg %p149
      $region42: #{_compare_pallas.1} parent=39 // pred_check_branch
        %2541 = sbr.rel (%p2539) target = $region44
      $region43: #{_compare_pallas.1} parent=39 // pred_region
        %s2542 = smul.u32 141, %s16
      $region44: #{_compare_pallas.1} parent=39 // pred_fallthru
        _
    $region40: #{_compare_pallas.1} parent=5 // pred_fallthru
      _
    %p2543 = scmp.le.s32.totalorder 2, %s11
    // Predicated region
    $region45: #{_compare_pallas.1} parent=5 // pred_check
      %p2544 = pneg %p2543
    $region46: #{_compare_pallas.1} parent=5 // pred_check_branch
      %2546 = sbr.rel (%p2544) target = $region48
    $region47: #{_compare_pallas.1} parent=5 // pred_region
      %s2547 = ssub.s32 %s11, 2
      // Predicated region
      $region49: #{_compare_pallas.1} parent=47 // pred_check
        %p2548 = pneg %p155
      $region50: #{_compare_pallas.1} parent=47 // pred_check_branch
        %2550 = sbr.rel (%p2548) target = $region52
      $region51: #{_compare_pallas.1} parent=47 // pred_region
        %s2551 = smul.u32 141, %s17
        %p2552 = scmp.lt.s32.totalorder %s2551, 281
        %s2553 = scalar_select %p2552, %s2551, 281
        %s2554 = smul.addr %s2553, 8
        %s2555 = scalar_lea.vmem %s5, %s2554
      $region52: #{_compare_pallas.1} parent=47 // pred_fallthru
        _
    $region48: #{_compare_pallas.1} parent=5 // pred_fallthru
      _
  $region6: #{_compare_pallas.1} parent=0 // loop_footer
    %s15 = sadd.s32 1, %s11
  $region7: #{_compare_pallas.1} parent=0 // loop_footer_branch
    %10 = sbr.rel target = $region3
  $region8: #{_compare_pallas.1} parent=0 // loop_exit
    _

</llo_original>
